<compile_context>
chip_gen: v7x
topology: tpu7x:2x2x1
jax: 0.10.0
libtpu: 0.0.40
codegen_flags: <defaults>
</compile_context>

<pallas_src>
import numpy as np
import jax
import jax.numpy as jnp
from jax.experimental import pallas as pl
from jax.experimental.pallas import tpu as pltpu

EPS = 1e-5
NEG_SLOPE = 0.1
_VMEM_LIMIT = 32 * 1024 * 1024  # explicit scoped-VMEM budget (safe on v5e/v6e/v7x)


# ----------------------------------------------------------------------------
# Pallas kernels: one deep-K matmul per row tile (all conv taps folded into K),
# with the optional residual add / BN+LeakyReLU epilogue fused in.
# ----------------------------------------------------------------------------
def _conv_kernel(x_ref, w_ref, o_ref):
    # x: (TM, K) bf16, w: (K, Cout) bf16  ->  o: (TM, Cout)
    o_ref[...] = jnp.dot(x_ref[...], w_ref[...],
                         preferred_element_type=jnp.float32).astype(o_ref.dtype)


def _conv_bn_lrelu_kernel(x_ref, w_ref, s_ref, b_ref, o_ref):
    # conv + fused eval-mode BN (folded scale/shift) + LeakyReLU(0.1) epilogue.
    # Epilogue math stays in f32 (VPU work rides free under the MXU); the cast
    # to o_ref.dtype (bf16) happens only at the store.
    acc = jnp.dot(x_ref[...], w_ref[...], preferred_element_type=jnp.float32)
    y = acc * s_ref[...] + b_ref[...]
    o_ref[...] = jnp.where(y > 0, y, NEG_SLOPE * y).astype(o_ref.dtype)


def _conv_res_kernel(x_ref, w_ref, r_ref, o_ref):
    # conv + fused residual add (residual kept in f32).
    acc = jnp.dot(x_ref[...], w_ref[...], preferred_element_type=jnp.float32)
    o_ref[...] = (acc + r_ref[...]).astype(o_ref.dtype)


# ----------------------------------------------------------------------------
# pallas_call wrapper
# ----------------------------------------------------------------------------
def _choose_row_tile(nm):
    # ~512 rows is the measured HBM-roofline sweet spot; keep >= 2 grid steps
    # whenever possible so the "parallel" grid axis can feed both v7x TCs.
    # (Tiles are multiples of 16 so bf16 sublane packing is always legal.)
    for tm in (512, 256, 128, 64, 32, 16):
        if nm % tm == 0 and nm // tm >= 2:
            return tm
    return nm


def _conv_matmul(patches, w, *, scale=None, shift=None, residual=None,
                 out_dtype=jnp.float32):
    # patches: (NM, K) bf16, w: (K, Cout) bf16
    NM, K = patches.shape
    Cout = w.shape[-1]
    TM = _choose_row_tile(NM)
    grid = (NM // TM,)

    x_spec = pl.BlockSpec((TM, K), lambda i: (i, 0))
    w_spec = pl.BlockSpec((K, Cout), lambda i: (0, 0))  # stays resident across grid
    o_spec = pl.BlockSpec((TM, Cout), lambda i: (i, 0))
    cparams = pltpu.CompilerParams(
        dimension_semantics=("parallel",),   # row tiles are independent
        vmem_limit_bytes=_VMEM_LIMIT)

    if scale is not None:
        kernel = _conv_bn_lrelu_kernel
        in_specs = [x_spec, w_spec,
                    pl.BlockSpec((1, Cout), lambda i: (0, 0)),
                    pl.BlockSpec((1, Cout), lambda i: (0, 0))]
        args = (patches, w,
                scale.reshape(1, Cout).astype(jnp.float32),
                shift.reshape(1, Cout).astype(jnp.float32))
    elif residual is not None:
        kernel = _conv_res_kernel
        in_specs = [x_spec, w_spec, pl.BlockSpec((TM, Cout), lambda i: (i, 0))]
        args = (patches, w, residual)
    else:
        kernel = _conv_kernel
        in_specs = [x_spec, w_spec]
        args = (patches, w)

    return pl.pallas_call(
        kernel,
        out_shape=jax.ShapeDtypeStruct((NM, Cout), out_dtype),
        grid=grid,
        in_specs=in_specs,
        out_specs=o_spec,
        compiler_params=cparams,
    )(*args)


# ----------------------------------------------------------------------------
# Conv wrappers (glue: pad / im2col-onto-K / reshapes; fused by XLA with any
# adjacent elementwise producer)
# ----------------------------------------------------------------------------
def _im2col3x3(x_nhwc, stride):
    # 3x3, pad=1 im2col with the 9 taps folded onto the channel (K) axis so the
    # Pallas kernel does ONE deep-K MXU matmul per tile.
    N, H, W, C = x_nhwc.shape
    Ho = (H - 1) // stride + 1
    Wo = (W - 1) // stride + 1
    xp = jnp.pad(x_nhwc, ((0, 0), (1, 1), (1, 1), (0, 0)))
    taps = []
    for kh in range(3):
        for kw in range(3):
            taps.append(xp[:, kh:kh + stride * (Ho - 1) + 1:stride,
                              kw:kw + stride * (Wo - 1) + 1:stride, :])
    patches = jnp.concatenate(taps, axis=-1)        # (N, Ho, Wo, 9*C)
    return patches.reshape(N * Ho * Wo, 9 * C), Ho, Wo


def conv3x3(x_nhwc, w_hwio, stride, *, bn_scale=None, bn_shift=None,
            residual=None, out_dtype=jnp.float32):
    # 3x3 conv, padding=1, bias=False (nn.Conv2d(..., 3, stride, 1, bias=False))
    N, H, W, Cin = x_nhwc.shape
    Cout = w_hwio.shape[-1]
    patches, Ho, Wo = _im2col3x3(x_nhwc, stride)
    patches = patches.astype(jnp.bfloat16)          # bf16 MXU operands
    wm = w_hwio.reshape(9 * Cin, Cout).astype(jnp.bfloat16)
    res = None
    if residual is not None:
        res = residual.reshape(N * Ho * Wo, Cout).astype(jnp.float32)
    out = _conv_matmul(patches, wm, scale=bn_scale, shift=bn_shift,
                       residual=res, out_dtype=out_dtype)
    return out.reshape(N, Ho, Wo, Cout)


def conv1x1(x_nhwc, w_hwio, stride):
    # 1x1 shortcut conv, padding=0, bias=False; no residual / epilogue.
    N, H, W, Cin = x_nhwc.shape
    Cout = w_hwio.shape[-1]
    xs = x_nhwc[:, ::stride, ::stride, :]
    Ho, Wo = xs.shape[1], xs.shape[2]
    patches = xs.reshape(N * Ho * Wo, Cin).astype(jnp.bfloat16)
    wm = w_hwio.reshape(Cin, Cout).astype(jnp.bfloat16)
    out = _conv_matmul(patches, wm)
    return out.reshape(N, Ho, Wo, Cout)


# ----------------------------------------------------------------------------
# BasicBlock / NetworkBlockOld forward (eval mode)
# ----------------------------------------------------------------------------
def _bn_lrelu(x, scale, shift):
    # Eval-mode BN folded to scale/shift + LeakyReLU(0.1).  Pure jnp: XLA fuses
    # it into the adjacent pad/im2col gather, so it costs no extra HBM pass.
    y = x * scale + shift
    return jnp.where(y > 0, y, NEG_SLOPE * y)


def basic_block_forward(x, p, stride, activate_before_residual):
    equal_in_out = "short_w" not in p
    if equal_in_out:
        a = _bn_lrelu(x, p["bn1_scale"], p["bn1_shift"])
        conv1_in = a
        residual = x
    elif activate_before_residual:
        a = _bn_lrelu(x, p["bn1_scale"], p["bn1_shift"])
        conv1_in = a
        residual = conv1x1(a, p["short_w"], stride)
    else:
        conv1_in = x            # quirk of the original block: raw x feeds conv1
        residual = conv1x1(x, p["short_w"], stride)

    # conv1 with fused BN2+LeakyReLU epilogue (bf16 output feeds conv2 patches).
    h = conv3x3(conv1_in, p["conv1_w"], stride,
                bn_scale=p["bn2_scale"], bn_shift=p["bn2_shift"],
                out_dtype=jnp.bfloat16)
    # TODO(synk): F.dropout(p=dropRate) is identity in eval mode; training-mode
    # stochastic dropout (pltpu.prng_*) is not implemented here.
    # conv2 with the residual add fused into the kernel.
    return conv3x3(h, p["conv2_w"], 1, residual=residual)


def network_block_forward(x, layer_params, stride, activate_before_residual):
    h = x
    for i, p in enumerate(layer_params):
        h = basic_block_forward(h, p, stride if i == 0 else 1,
                                activate_before_residual)
    return h


# ----------------------------------------------------------------------------
# Deterministic parameter init (shapes per nn.BatchNorm2d / nn.Conv2d in block)
# ----------------------------------------------------------------------------
def _init_bn(keys, c):
    gamma = jax.random.uniform(keys[0], (c,), minval=0.5, maxval=1.5)
    beta = 0.1 * jax.random.normal(keys[1], (c,))
    mean = 0.1 * jax.random.normal(keys[2], (c,))
    var = jax.random.uniform(keys[3], (c,), minval=0.5, maxval=1.5)
    scale = gamma / jnp.sqrt(var + EPS)
    shift = beta - mean * scale
    return scale.astype(jnp.float32), shift.astype(jnp.float32)


def init_block_params(key, cin, cout):
    ks = jax.random.split(key, 11)
    bn1_scale, bn1_shift = _init_bn(ks[0:4], cin)
    bn2_scale, bn2_shift = _init_bn(ks[4:8], cout)
    conv1_w = (jax.random.normal(ks[8], (3, 3, cin, cout))
               * np.sqrt(2.0 / (9 * cout))).astype(jnp.float32)
    conv2_w = (jax.random.normal(ks[9], (3, 3, cout, cout))
               * np.sqrt(2.0 / (9 * cout))).astype(jnp.float32)
    p = {"bn1_scale": bn1_scale, "bn1_shift": bn1_shift,
         "bn2_scale": bn2_scale, "bn2_shift": bn2_shift,
         "conv1_w": conv1_w, "conv2_w": conv2_w}
    if cin != cout:
        p["short_w"] = (jax.random.normal(ks[10], (1, 1, cin, cout))
                        * np.sqrt(2.0 / cout)).astype(jnp.float32)
    return p


def init_network_block_params(key, nb_layers, in_planes, out_planes):
    keys = jax.random.split(key, nb_layers)
    params = []
    for i in range(nb_layers):
        cin = in_planes if i == 0 else out_planes
        params.append(init_block_params(keys[i], cin, out_planes))
    return params


# ----------------------------------------------------------------------------
# Pure-JAX reference (for correctness check)
# ----------------------------------------------------------------------------
def _bn_lrelu_ref(x, scale, shift):
    y = x * scale + shift
    return jnp.where(y > 0, y, NEG_SLOPE * y)


def _conv_ref(x, w, stride, padding):
    return jax.lax.conv_general_dilated(
        x, w, (stride, stride), padding,
        dimension_numbers=("NHWC", "HWIO", "NHWC"),
        precision=jax.lax.Precision.HIGHEST)


def _basic_block_ref(x, p, stride, activate_before_residual):
    equal_in_out = "short_w" not in p
    if (not equal_in_out) and activate_before_residual:
        x = _bn_lrelu_ref(x, p["bn1_scale"], p["bn1_shift"])
        out = x
    else:
        out = _bn_lrelu_ref(x, p["bn1_scale"], p["bn1_shift"])
    h = _conv_ref(out if equal_in_out else x, p["conv1_w"], stride, [(1, 1), (1, 1)])
    h = _bn_lrelu_ref(h, p["bn2_scale"], p["bn2_shift"])
    residual = x if equal_in_out else _conv_ref(x, p["short_w"], stride, [(0, 0), (0, 0)])
    return _conv_ref(h, p["conv2_w"], 1, [(1, 1), (1, 1)]) + residual


def network_block_ref(x, layer_params, stride, activate_before_residual):
    h = x
    for i, p in enumerate(layer_params):
        h = _basic_block_ref(h, p, stride if i == 0 else 1,
                             activate_before_residual)
    return h


# ----------------------------------------------------------------------------
if __name__ == "__main__":
    key = jax.random.PRNGKey(0)
    k_x, k_p = jax.random.split(key)

    # NetworkBlockOld(nb_layers=2, in_planes=4, out_planes=8, block=BasicBlock,
    #                 stride=2, dropRate=0.2, activate_before_residual=True)
    N, C_in, H, W = 2, 4, 16, 16
    nb_layers, out_planes, stride = 2, 8, 2
    activate_before_residual = True

    x_nchw = jax.random.normal(k_x, (N, C_in, H, W), jnp.float32)  # PyTorch NCHW
    x_nhwc = jnp.transpose(x_nchw, (0, 2, 3, 1))                   # kernels use NHWC

    params = init_network_block_params(k_p, nb_layers, C_in, out_planes)

    fwd = jax.jit(lambda xx: network_block_forward(
        xx, params, stride, activate_before_residual))
    out = jax.block_until_ready(fwd(x_nhwc))

    assert out.shape == (N, H // stride, W // stride, out_planes), out.shape

    ref = network_block_ref(x_nhwc, params, stride, activate_before_residual)
    # bf16 MXU operands (f32 accumulation) vs an f32 HIGHEST-precision reference.
    np.testing.assert_allclose(np.asarray(out), np.asarray(ref),
                               rtol=3e-2, atol=3e-2)
    print("KERNEL_OK")
</pallas_src>

<mosaic_0001>
module attributes {stable_mosaic.version = 11 : i64} {
  func.func @_conv_kernel(%arg0: i32, %arg1: memref<64x4xbf16, #tpu.memory_space<vmem>>, %arg2: memref<4x8xbf16, #tpu.memory_space<vmem>>, %arg3: memref<64x8xf32, #tpu.memory_space<vmem>>) attributes {dimension_semantics = [#tpu.dimension_semantics<parallel>], iteration_bounds = array<i64: 2>, scalar_prefetch = 0 : i64, scratch_operands = 0 : i64, tpu.core_type = #tpu.core_type<tc>, window_params = [{transform_indices = @transform_0, window_bounds = array<i64: 64, 4>}, {pipeline_mode = #tpu.pipeline_mode<synchronous>, transform_indices = @transform_1, window_bounds = array<i64: 4, 8>}, {transform_indices = @transform_2, window_bounds = array<i64: 64, 8>}]} {
    %c0 = arith.constant 0 : index
    %c0_0 = arith.constant 0 : index
    %0 = vector.load %arg1[%c0, %c0_0] : memref<64x4xbf16, #tpu.memory_space<vmem>>, vector<64x4xbf16>
    %c0_1 = arith.constant 0 : index
    %c0_2 = arith.constant 0 : index
    %1 = vector.load %arg2[%c0_1, %c0_2] : memref<4x8xbf16, #tpu.memory_space<vmem>>, vector<4x8xbf16>
    %cst = arith.constant dense<0.000000e+00> : vector<64x8xf32>
    %2 = tpu.matmul %0, %1, %cst {dimension_numbers = #tpu.dot_dimension_numbers<[1], [0], [0], [1], [0, 0, 1, 1], [], []>} : vector<64x4xbf16>, vector<4x8xbf16>, vector<64x8xf32> -> vector<64x8xf32>
    %c0_3 = arith.constant 0 : index
    %c0_4 = arith.constant 0 : index
    %3 = vector.load %arg3[%c0_3, %c0_4] : memref<64x8xf32, #tpu.memory_space<vmem>>, vector<64x8xf32>
    tpu.vector_store %arg3[%c0_3, %c0_4], %2 {strides = array<i32>} : memref<64x8xf32, #tpu.memory_space<vmem>>, vector<64x8xf32>,
    return
  }
  func.func @transform_0(%arg0: i32) -> (i32, i32) {
    %c0_i32 = arith.constant 0 : i32
    %c0_i32_0 = arith.constant 0 : i32
    return %arg0, %c0_i32 : i32, i32
  }
  func.func @transform_1(%arg0: i32) -> (i32, i32) {
    %c0_i32 = arith.constant 0 : i32
    %c0_i32_0 = arith.constant 0 : i32
    %c0_i32_1 = arith.constant 0 : i32
    return %c0_i32, %c0_i32_0 : i32, i32
  }
  func.func @transform_2(%arg0: i32) -> (i32, i32) {
    %c0_i32 = arith.constant 0 : i32
    %c0_i32_0 = arith.constant 0 : i32
    return %arg0, %c0_i32 : i32, i32
  }
}

module attributes {stable_mosaic.version = 11 : i64} {
  func.func @_conv_bn_lrelu_kernel(%arg0: i32, %arg1: memref<64x36xbf16, #tpu.memory_space<vmem>>, %arg2: memref<36x8xbf16, #tpu.memory_space<vmem>>, %arg3: memref<1x8xf32, #tpu.memory_space<vmem>>, %arg4: memref<1x8xf32, #tpu.memory_space<vmem>>, %arg5: memref<64x8xbf16, #tpu.memory_space<vmem>>) attributes {dimension_semantics = [#tpu.dimension_semantics<parallel>], iteration_bounds = array<i64: 2>, scalar_prefetch = 0 : i64, scratch_operands = 0 : i64, tpu.core_type = #tpu.core_type<tc>, window_params = [{transform_indices = @transform_0, window_bounds = array<i64: 64, 36>}, {pipeline_mode = #tpu.pipeline_mode<synchronous>, transform_indices = @transform_1, window_bounds = array<i64: 36, 8>}, {pipeline_mode = #tpu.pipeline_mode<synchronous>, transform_indices = @transform_2, window_bounds = array<i64: 1, 8>}, {pipeline_mode = #tpu.pipeline_mode<synchronous>, transform_indices = @transform_3, window_bounds = array<i64: 1, 8>}, {transform_indices = @transform_4, window_bounds = array<i64: 64, 8>}]} {
    %c0 = arith.constant 0 : index
    %c0_0 = arith.constant 0 : index
    %0 = vector.load %arg1[%c0, %c0_0] : memref<64x36xbf16, #tpu.memory_space<vmem>>, vector<64x36xbf16>
    %c0_1 = arith.constant 0 : index
    %c0_2 = arith.constant 0 : index
    %1 = vector.load %arg2[%c0_1, %c0_2] : memref<36x8xbf16, #tpu.memory_space<vmem>>, vector<36x8xbf16>
    %cst = arith.constant dense<0.000000e+00> : vector<64x8xf32>
    %2 = tpu.matmul %0, %1, %cst {dimension_numbers = #tpu.dot_dimension_numbers<[1], [0], [0], [1], [0, 0, 1, 1], [], []>} : vector<64x36xbf16>, vector<36x8xbf16>, vector<64x8xf32> -> vector<64x8xf32>
    %c0_3 = arith.constant 0 : index
    %c0_4 = arith.constant 0 : index
    %3 = vector.load %arg3[%c0_3, %c0_4] : memref<1x8xf32, #tpu.memory_space<vmem>>, vector<1x8xf32>
    %4 = vector.broadcast %3 : vector<1x8xf32> to vector<64x8xf32>
    %5 = arith.mulf %2, %4 : vector<64x8xf32>
    %c0_5 = arith.constant 0 : index
    %c0_6 = arith.constant 0 : index
    %6 = vector.load %arg4[%c0_5, %c0_6] : memref<1x8xf32, #tpu.memory_space<vmem>>, vector<1x8xf32>
    %7 = vector.broadcast %6 : vector<1x8xf32> to vector<64x8xf32>
    %8 = arith.addf %5, %7 : vector<64x8xf32>
    %cst_7 = arith.constant 0.000000e+00 : f32
    %9 = vector.broadcast %cst_7 : f32 to vector<64x8xf32>
    %10 = arith.cmpf ogt, %8, %9 : vector<64x8xf32>
    %cst_8 = arith.constant 1.000000e-01 : f32
    %11 = vector.broadcast %cst_8 : f32 to vector<64x8xf32>
    %12 = arith.mulf %11, %8 : vector<64x8xf32>
    %13 = arith.select %10, %8, %12 : vector<64x8xi1>, vector<64x8xf32>
    %14 = arith.truncf %13 : vector<64x8xf32> to vector<64x8xbf16>
    %c0_9 = arith.constant 0 : index
    %c0_10 = arith.constant 0 : index
    %15 = vector.load %arg5[%c0_9, %c0_10] : memref<64x8xbf16, #tpu.memory_space<vmem>>, vector<64x8xbf16>
    tpu.vector_store %arg5[%c0_9, %c0_10], %14 {strides = array<i32>} : memref<64x8xbf16, #tpu.memory_space<vmem>>, vector<64x8xbf16>,
    return
  }
  func.func @transform_0(%arg0: i32) -> (i32, i32) {
    %c0_i32 = arith.constant 0 : i32
    %c0_i32_0 = arith.constant 0 : i32
    return %arg0, %c0_i32 : i32, i32
  }
  func.func @transform_1(%arg0: i32) -> (i32, i32) {
    %c0_i32 = arith.constant 0 : i32
    %c0_i32_0 = arith.constant 0 : i32
    %c0_i32_1 = arith.constant 0 : i32
    return %c0_i32, %c0_i32_0 : i32, i32
  }
  func.func @transform_2(%arg0: i32) -> (i32, i32) {
    %c0_i32 = arith.constant 0 : i32
    %c0_i32_0 = arith.constant 0 : i32
    %c0_i32_1 = arith.constant 0 : i32
    return %c0_i32, %c0_i32_0 : i32, i32
  }
  func.func @transform_3(%arg0: i32) -> (i32, i32) {
    %c0_i32 = arith.constant 0 : i32
    %c0_i32_0 = arith.constant 0 : i32
    %c0_i32_1 = arith.constant 0 : i32
    return %c0_i32, %c0_i32_0 : i32, i32
  }
  func.func @transform_4(%arg0: i32) -> (i32, i32) {
    %c0_i32 = arith.constant 0 : i32
    %c0_i32_0 = arith.constant 0 : i32
    return %arg0, %c0_i32 : i32, i32
  }
}

module attributes {stable_mosaic.version = 11 : i64} {
  func.func @_conv_res_kernel(%arg0: i32, %arg1: memref<64x72xbf16, #tpu.memory_space<vmem>>, %arg2: memref<72x8xbf16, #tpu.memory_space<vmem>>, %arg3: memref<64x8xf32, #tpu.memory_space<vmem>>, %arg4: memref<64x8xf32, #tpu.memory_space<vmem>>) attributes {dimension_semantics = [#tpu.dimension_semantics<parallel>], iteration_bounds = array<i64: 2>, scalar_prefetch = 0 : i64, scratch_operands = 0 : i64, tpu.core_type = #tpu.core_type<tc>, window_params = [{transform_indices = @transform_0, window_bounds = array<i64: 64, 72>}, {pipeline_mode = #tpu.pipeline_mode<synchronous>, transform_indices = @transform_1, window_bounds = array<i64: 72, 8>}, {transform_indices = @transform_2, window_bounds = array<i64: 64, 8>}, {transform_indices = @transform_3, window_bounds = array<i64: 64, 8>}]} {
    %c0 = arith.constant 0 : index
    %c0_0 = arith.constant 0 : index
    %0 = vector.load %arg1[%c0, %c0_0] : memref<64x72xbf16, #tpu.memory_space<vmem>>, vector<64x72xbf16>
    %c0_1 = arith.constant 0 : index
    %c0_2 = arith.constant 0 : index
    %1 = vector.load %arg2[%c0_1, %c0_2] : memref<72x8xbf16, #tpu.memory_space<vmem>>, vector<72x8xbf16>
    %cst = arith.constant dense<0.000000e+00> : vector<64x8xf32>
    %2 = tpu.matmul %0, %1, %cst {dimension_numbers = #tpu.dot_dimension_numbers<[1], [0], [0], [1], [0, 0, 1, 1], [], []>} : vector<64x72xbf16>, vector<72x8xbf16>, vector<64x8xf32> -> vector<64x8xf32>
    %c0_3 = arith.constant 0 : index
    %c0_4 = arith.constant 0 : index
    %3 = vector.load %arg3[%c0_3, %c0_4] : memref<64x8xf32, #tpu.memory_space<vmem>>, vector<64x8xf32>
    %4 = arith.addf %2, %3 : vector<64x8xf32>
    %c0_5 = arith.constant 0 : index
    %c0_6 = arith.constant 0 : index
    %5 = vector.load %arg4[%c0_5, %c0_6] : memref<64x8xf32, #tpu.memory_space<vmem>>, vector<64x8xf32>
    tpu.vector_store %arg4[%c0_5, %c0_6], %4 {strides = array<i32>} : memref<64x8xf32, #tpu.memory_space<vmem>>, vector<64x8xf32>,
    return
  }
  func.func @transform_0(%arg0: i32) -> (i32, i32) {
    %c0_i32 = arith.constant 0 : i32
    %c0_i32_0 = arith.constant 0 : i32
    return %arg0, %c0_i32 : i32, i32
  }
  func.func @transform_1(%arg0: i32) -> (i32, i32) {
    %c0_i32 = arith.constant 0 : i32
    %c0_i32_0 = arith.constant 0 : i32
    %c0_i32_1 = arith.constant 0 : i32
    return %c0_i32, %c0_i32_0 : i32, i32
  }
  func.func @transform_2(%arg0: i32) -> (i32, i32) {
    %c0_i32 = arith.constant 0 : i32
    %c0_i32_0 = arith.constant 0 : i32
    return %arg0, %c0_i32 : i32, i32
  }
  func.func @transform_3(%arg0: i32) -> (i32, i32) {
    %c0_i32 = arith.constant 0 : i32
    %c0_i32_0 = arith.constant 0 : i32
    return %arg0, %c0_i32 : i32, i32
  }
}

module attributes {stable_mosaic.version = 11 : i64} {
  func.func @_conv_bn_lrelu_kernel(%arg0: i32, %arg1: memref<64x72xbf16, #tpu.memory_space<vmem>>, %arg2: memref<72x8xbf16, #tpu.memory_space<vmem>>, %arg3: memref<1x8xf32, #tpu.memory_space<vmem>>, %arg4: memref<1x8xf32, #tpu.memory_space<vmem>>, %arg5: memref<64x8xbf16, #tpu.memory_space<vmem>>) attributes {dimension_semantics = [#tpu.dimension_semantics<parallel>], iteration_bounds = array<i64: 2>, scalar_prefetch = 0 : i64, scratch_operands = 0 : i64, tpu.core_type = #tpu.core_type<tc>, window_params = [{transform_indices = @transform_0, window_bounds = array<i64: 64, 72>}, {pipeline_mode = #tpu.pipeline_mode<synchronous>, transform_indices = @transform_1, window_bounds = array<i64: 72, 8>}, {pipeline_mode = #tpu.pipeline_mode<synchronous>, transform_indices = @transform_2, window_bounds = array<i64: 1, 8>}, {pipeline_mode = #tpu.pipeline_mode<synchronous>, transform_indices = @transform_3, window_bounds = array<i64: 1, 8>}, {transform_indices = @transform_4, window_bounds = array<i64: 64, 8>}]} {
    %c0 = arith.constant 0 : index
    %c0_0 = arith.constant 0 : index
    %0 = vector.load %arg1[%c0, %c0_0] : memref<64x72xbf16, #tpu.memory_space<vmem>>, vector<64x72xbf16>
    %c0_1 = arith.constant 0 : index
    %c0_2 = arith.constant 0 : index
    %1 = vector.load %arg2[%c0_1, %c0_2] : memref<72x8xbf16, #tpu.memory_space<vmem>>, vector<72x8xbf16>
    %cst = arith.constant dense<0.000000e+00> : vector<64x8xf32>
    %2 = tpu.matmul %0, %1, %cst {dimension_numbers = #tpu.dot_dimension_numbers<[1], [0], [0], [1], [0, 0, 1, 1], [], []>} : vector<64x72xbf16>, vector<72x8xbf16>, vector<64x8xf32> -> vector<64x8xf32>
    %c0_3 = arith.constant 0 : index
    %c0_4 = arith.constant 0 : index
    %3 = vector.load %arg3[%c0_3, %c0_4] : memref<1x8xf32, #tpu.memory_space<vmem>>, vector<1x8xf32>
    %4 = vector.broadcast %3 : vector<1x8xf32> to vector<64x8xf32>
    %5 = arith.mulf %2, %4 : vector<64x8xf32>
    %c0_5 = arith.constant 0 : index
    %c0_6 = arith.constant 0 : index
    %6 = vector.load %arg4[%c0_5, %c0_6] : memref<1x8xf32, #tpu.memory_space<vmem>>, vector<1x8xf32>
    %7 = vector.broadcast %6 : vector<1x8xf32> to vector<64x8xf32>
    %8 = arith.addf %5, %7 : vector<64x8xf32>
    %cst_7 = arith.constant 0.000000e+00 : f32
    %9 = vector.broadcast %cst_7 : f32 to vector<64x8xf32>
    %10 = arith.cmpf ogt, %8, %9 : vector<64x8xf32>
    %cst_8 = arith.constant 1.000000e-01 : f32
    %11 = vector.broadcast %cst_8 : f32 to vector<64x8xf32>
    %12 = arith.mulf %11, %8 : vector<64x8xf32>
    %13 = arith.select %10, %8, %12 : vector<64x8xi1>, vector<64x8xf32>
    %14 = arith.truncf %13 : vector<64x8xf32> to vector<64x8xbf16>
    %c0_9 = arith.constant 0 : index
    %c0_10 = arith.constant 0 : index
    %15 = vector.load %arg5[%c0_9, %c0_10] : memref<64x8xbf16, #tpu.memory_space<vmem>>, vector<64x8xbf16>
    tpu.vector_store %arg5[%c0_9, %c0_10], %14 {strides = array<i32>} : memref<64x8xbf16, #tpu.memory_space<vmem>>, vector<64x8xbf16>,
    return
  }
  func.func @transform_0(%arg0: i32) -> (i32, i32) {
    %c0_i32 = arith.constant 0 : i32
    %c0_i32_0 = arith.constant 0 : i32
    return %arg0, %c0_i32 : i32, i32
  }
  func.func @transform_1(%arg0: i32) -> (i32, i32) {
    %c0_i32 = arith.constant 0 : i32
    %c0_i32_0 = arith.constant 0 : i32
    %c0_i32_1 = arith.constant 0 : i32
    return %c0_i32, %c0_i32_0 : i32, i32
  }
  func.func @transform_2(%arg0: i32) -> (i32, i32) {
    %c0_i32 = arith.constant 0 : i32
    %c0_i32_0 = arith.constant 0 : i32
    %c0_i32_1 = arith.constant 0 : i32
    return %c0_i32, %c0_i32_0 : i32, i32
  }
  func.func @transform_3(%arg0: i32) -> (i32, i32) {
    %c0_i32 = arith.constant 0 : i32
    %c0_i32_0 = arith.constant 0 : i32
    %c0_i32_1 = arith.constant 0 : i32
    return %c0_i32, %c0_i32_0 : i32, i32
  }
  func.func @transform_4(%arg0: i32) -> (i32, i32) {
    %c0_i32 = arith.constant 0 : i32
    %c0_i32_0 = arith.constant 0 : i32
    return %arg0, %c0_i32 : i32, i32
  }
}

module attributes {stable_mosaic.version = 11 : i64} {
  func.func @_conv_res_kernel(%arg0: i32, %arg1: memref<64x72xbf16, #tpu.memory_space<vmem>>, %arg2: memref<72x8xbf16, #tpu.memory_space<vmem>>, %arg3: memref<64x8xf32, #tpu.memory_space<vmem>>, %arg4: memref<64x8xf32, #tpu.memory_space<vmem>>) attributes {dimension_semantics = [#tpu.dimension_semantics<parallel>], iteration_bounds = array<i64: 2>, scalar_prefetch = 0 : i64, scratch_operands = 0 : i64, tpu.core_type = #tpu.core_type<tc>, window_params = [{transform_indices = @transform_0, window_bounds = array<i64: 64, 72>}, {pipeline_mode = #tpu.pipeline_mode<synchronous>, transform_indices = @transform_1, window_bounds = array<i64: 72, 8>}, {transform_indices = @transform_2, window_bounds = array<i64: 64, 8>}, {transform_indices = @transform_3, window_bounds = array<i64: 64, 8>}]} {
    %c0 = arith.constant 0 : index
    %c0_0 = arith.constant 0 : index
    %0 = vector.load %arg1[%c0, %c0_0] : memref<64x72xbf16, #tpu.memory_space<vmem>>, vector<64x72xbf16>
    %c0_1 = arith.constant 0 : index
    %c0_2 = arith.constant 0 : index
    %1 = vector.load %arg2[%c0_1, %c0_2] : memref<72x8xbf16, #tpu.memory_space<vmem>>, vector<72x8xbf16>
    %cst = arith.constant dense<0.000000e+00> : vector<64x8xf32>
    %2 = tpu.matmul %0, %1, %cst {dimension_numbers = #tpu.dot_dimension_numbers<[1], [0], [0], [1], [0, 0, 1, 1], [], []>} : vector<64x72xbf16>, vector<72x8xbf16>, vector<64x8xf32> -> vector<64x8xf32>
    %c0_3 = arith.constant 0 : index
    %c0_4 = arith.constant 0 : index
    %3 = vector.load %arg3[%c0_3, %c0_4] : memref<64x8xf32, #tpu.memory_space<vmem>>, vector<64x8xf32>
    %4 = arith.addf %2, %3 : vector<64x8xf32>
    %c0_5 = arith.constant 0 : index
    %c0_6 = arith.constant 0 : index
    %5 = vector.load %arg4[%c0_5, %c0_6] : memref<64x8xf32, #tpu.memory_space<vmem>>, vector<64x8xf32>
    tpu.vector_store %arg4[%c0_5, %c0_6], %4 {strides = array<i32>} : memref<64x8xf32, #tpu.memory_space<vmem>>, vector<64x8xf32>,
    return
  }
  func.func @transform_0(%arg0: i32) -> (i32, i32) {
    %c0_i32 = arith.constant 0 : i32
    %c0_i32_0 = arith.constant 0 : i32
    return %arg0, %c0_i32 : i32, i32
  }
  func.func @transform_1(%arg0: i32) -> (i32, i32) {
    %c0_i32 = arith.constant 0 : i32
    %c0_i32_0 = arith.constant 0 : i32
    %c0_i32_1 = arith.constant 0 : i32
    return %c0_i32, %c0_i32_0 : i32, i32
  }
  func.func @transform_2(%arg0: i32) -> (i32, i32) {
    %c0_i32 = arith.constant 0 : i32
    %c0_i32_0 = arith.constant 0 : i32
    return %arg0, %c0_i32 : i32, i32
  }
  func.func @transform_3(%arg0: i32) -> (i32, i32) {
    %c0_i32 = arith.constant 0 : i32
    %c0_i32_0 = arith.constant 0 : i32
    return %arg0, %c0_i32 : i32, i32
  }
}

</mosaic_0001>

<llo_original>
// kernel: _lambda_.5
$region0: #{_lambda_.5}
  #allocation0 [shape = 'u32[]', space=smem, size = 0x4, offset = 0x4, fixed_abs, tag = 'smem constant byte address 0x4 - core index']
  #allocation1 [shape = 'u32[144,128]{1,0:T(1,128)}', space=vmem, size = 0x12000, scoped, tag = 'internal scratch']
  %s0 = inlined_call_operand.vmem [shape: bf16[128,4], index: 0, kind: input, shape index: {}]
  %s1 = inlined_call_operand.vmem [shape: bf16[4,8], index: 1, kind: input, shape index: {}]
  %s2 = inlined_call_operand.vmem [shape: f32[128,8], index: 2, kind: output, shape index: {}]
  %s3 = sld [smem:[#allocation0]]
  $region41: #{_lambda_.5} parent=0
    _
  %s5 = ssub.s32 1, %s3
  %s6 = scalar_select 0, %s5, %s3
  loop: start=0, step=1, limit=4
  $region2: #{_lambda_.5} parent=0 // loop_pre_header
    _
  $region3: #{_lambda_.5} parent=0 // loop_header
    %s8 = sphi 0, %s12
    %p9 = scmp.ge.s32.totalorder %s8, 4
    %s18 = sphi 0, %s20
    %s21 = sphi 0, %s18
    %s22 = sphi 0, %s21
    %s38 = sphi 0, %s22
    %s42 = sphi 0, %s42
    %s44 = sphi 0, %s42
    %s45 = sphi 0, %s44
    %s59 = sphi 0, %s45
    %s65 = sphi 0, %s67
    %s68 = sphi 0, %s65
    %s69 = sphi 0, %s68
    %s85 = sphi 0, %s69
  $region4: #{_lambda_.5} parent=0 // loop_header_branch
    %11 = sbr.rel (%p9) target = $region8
  $region5: #{_lambda_.5} parent=0 // loop_body
    %s13 = ssub.s32 %s8, 1
    %s14 = ssub.s32 %s8, 2
    %s15 = sadd.s32 %s8, 1
    %s16 = ssub.s32 %s8, %s15
    %p17 = scmp.eq.s32.totalorder %s16, 0
    %s19 = sadd.s32 %s18, 1
    %s20 = scalar_select %p17, %s18, %s19
    %p23 = pneg %p17
    %p24 = scmp.eq.s32.totalorder %s8, 1
    %p25 = por %p23, %p24
    %p26 = scmp.ne.s32.totalorder %s18, %s21
    %p27 = scmp.eq.s32.totalorder %s8, 0
    %p28 = por %p26, %p27
    %p29 = scmp.ne.s32.totalorder %s18, %s21
    %p30 = scmp.eq.s32.totalorder %s13, 1
    %p31 = por %p29, %p30
    %p32 = scmp.ne.s32.totalorder %s21, %s22
    %p33 = scmp.eq.s32.totalorder %s13, 0
    %p34 = por %p32, %p33
    %p35 = scmp.ne.s32.totalorder %s21, %s22
    %p36 = scmp.eq.s32.totalorder %s14, 1
    %p37 = por %p35, %p36
    %p39 = scmp.ne.s32.totalorder %s22, %s38
    %p40 = scmp.eq.s32.totalorder %s14, 0
    %p41 = por %p39, %p40
    %s43 = sadd.s32 %s42, 1
    %p46 = scmp.eq.s32.totalorder %s8, 1
    %p47 = scmp.ne.s32.totalorder %s42, %s44
    %p48 = scmp.eq.s32.totalorder %s8, 0
    %p49 = por %p47, %p48
    %p50 = scmp.ne.s32.totalorder %s42, %s44
    %p51 = scmp.eq.s32.totalorder %s13, 1
    %p52 = por %p50, %p51
    %p53 = scmp.ne.s32.totalorder %s44, %s45
    %p54 = scmp.eq.s32.totalorder %s13, 0
    %p55 = por %p53, %p54
    %p56 = scmp.ne.s32.totalorder %s44, %s45
    %p57 = scmp.eq.s32.totalorder %s14, 1
    %p58 = por %p56, %p57
    %p60 = scmp.ne.s32.totalorder %s45, %s59
    %p61 = scmp.eq.s32.totalorder %s14, 0
    %p62 = por %p60, %p61
    %s63 = ssub.s32 %s8, %s15
    %p64 = scmp.eq.s32.totalorder %s63, 0
    %s66 = sadd.s32 %s65, 1
    %s67 = scalar_select %p64, %s65, %s66
    %p70 = pneg %p64
    %p71 = scmp.eq.s32.totalorder %s8, 1
    %p72 = por %p70, %p71
    %p73 = scmp.ne.s32.totalorder %s65, %s68
    %p74 = scmp.eq.s32.totalorder %s8, 0
    %p75 = por %p73, %p74
    %p76 = scmp.ne.s32.totalorder %s65, %s68
    %p77 = scmp.eq.s32.totalorder %s13, 1
    %p78 = por %p76, %p77
    %p79 = scmp.ne.s32.totalorder %s68, %s69
    %p80 = scmp.eq.s32.totalorder %s13, 0
    %p81 = por %p79, %p80
    %p82 = scmp.ne.s32.totalorder %s68, %s69
    %p83 = scmp.eq.s32.totalorder %s14, 1
    %p84 = por %p82, %p83
    %p86 = scmp.ne.s32.totalorder %s69, %s85
    %p87 = scmp.eq.s32.totalorder %s14, 0
    %p88 = por %p86, %p87
    %p89 = scmp.le.s32.totalorder 1, %s8
    %p90 = scmp.lt.s32.totalorder %s8, 3
    %p91 = pnand %p89, %p90
    %p92 = pneg %p91
    // Predicated region
    $region9: #{_lambda_.5} parent=5 // pred_check
      _
    $region10: #{_lambda_.5} parent=5 // pred_check_branch
      %94 = sbr.rel (%p91) target = $region12
    $region11: #{_lambda_.5} parent=5 // pred_region
      %s95 = ssub.s32 %s8, 1
      // Predicated region
      $region13: #{_lambda_.5} parent=11 // pred_check
        %p96 = pneg %p55
      $region14: #{_lambda_.5} parent=11 // pred_check_branch
        %98 = sbr.rel (%p96) target = $region16
      $region15: #{_lambda_.5} parent=11 // pred_region
        _
      $region16: #{_lambda_.5} parent=11 // pred_fallthru
        _
    $region12: #{_lambda_.5} parent=5 // pred_fallthru
      _
    %p99 = scmp.lt.s32.totalorder %s8, 2
    // Predicated region
    $region17: #{_lambda_.5} parent=5 // pred_check
      %p100 = pneg %p99
    $region18: #{_lambda_.5} parent=5 // pred_check_branch
      %102 = sbr.rel (%p100) target = $region20
    $region19: #{_lambda_.5} parent=5 // pred_region
      // Predicated region
      $region21: #{_lambda_.5} parent=19 // pred_check
        %p103 = pneg %p28
      $region22: #{_lambda_.5} parent=19 // pred_check_branch
        %105 = sbr.rel (%p103) target = $region24
      $region23: #{_lambda_.5} parent=19 // pred_region
        %s106 = smul.u32 8, %s8
        %p107 = scmp.lt.s32.totalorder %s106, 15
        %s108 = scalar_select %p107, %s106, 15
        %s109 = smul.addr %s108, 4
        %s110 = scalar_lea.vmem %s0, %s109
        %s111 = smul.u32 8, %s8
      $region24: #{_lambda_.5} parent=19 // pred_fallthru
        _
    $region20: #{_lambda_.5} parent=5 // pred_fallthru
      _
    %p112 = scmp.le.s32.totalorder 1, %s8
    %p113 = scmp.lt.s32.totalorder %s8, 3
    %p114 = pnand %p112, %p113
    %p115 = pneg %p114
    // Predicated region
    $region25: #{_lambda_.5} parent=5 // pred_check
      _
    $region26: #{_lambda_.5} parent=5 // pred_check_branch
      %117 = sbr.rel (%p114) target = $region28
    $region27: #{_lambda_.5} parent=5 // pred_region
      %s118 = ssub.s32 %s8, 1
      %s119 = smul.u32 8, %s13
      %p120 = scmp.lt.s32.totalorder %s119, 15
      %s121 = scalar_select %p120, %s119, 15
      %s122 = smul.addr %s121, 4
      %s123 = scalar_lea.vmem %s0, %s122
      %p124 = pneg %p34
      %p125 = pneg %p31
      %p126 = pneg %p55
      %p127 = pneg %p52
      %p128 = pneg %p81
      %p129 = pneg %p78
      %s130 = smul.u32 8, %s13
      %p131 = scmp.lt.s32.totalorder %s130, 15
      %s132 = scalar_select %p131, %s130, 15
      %s133 = smul.addr %s132, 8
      %s134 = scalar_lea.vmem %s2, %s133
      %s135 = smul.u32 8, %s13
      %p136 = scmp.lt.s32.totalorder %s135, 15
      %s137 = scalar_select %p136, %s135, 15
      %s138 = smul.addr %s137, 4
      %s139 = scalar_lea.vmem %s0, %s138
      %s140 = smul.u32 8, %s13
      %s141 = smul.u32 8, %s13
      %p142 = scmp.lt.s32.totalorder %s141, 15
      %s143 = scalar_select %p142, %s141, 15
      %s144 = smul.addr %s143, 8
      %s145 = scalar_lea.vmem %s2, %s144
      %s146 = smul.u32 8, %s13
      %v148 = vld [vmem:[%s139] sm:$0xf]
      %v149 = vld [vmem:[%s139 + $0x4] sm:$0xf]
      %v150 = vld [vmem:[%s139 + $0x8] sm:$0xf]
      %v151 = vld [vmem:[%s139 + $0xc] sm:$0xf]
      %v152 = vld [vmem:[%s139 + $0x10] sm:$0xf]
      %v153 = vld [vmem:[%s139 + $0x14] sm:$0xf]
      %v154 = vld [vmem:[%s139 + $0x18] sm:$0xf]
      %v155 = vld [vmem:[%s139 + $0x1c] sm:$0xf]
      %v156 = vld [vmem:[%s1] sm:$0x3]
      %v165 = vunpack.c.l.b16 %v148
      %v166 = vunpack.c.l.b16 %v149
      %v167 = vunpack.c.l.b16 %v150
      %v168 = vunpack.c.l.b16 %v151
      %v169 = vunpack.c.l.b16 %v152
      %v170 = vunpack.c.l.b16 %v153
      %v171 = vunpack.c.l.b16 %v154
      %v172 = vunpack.c.l.b16 %v155
      %v173 = vpack.c.b16 %v166, %v165
      %v174 = vpack.c.b16 %v168, %v167
      %v175 = vpack.c.b16 %v170, %v169
      %v176 = vpack.c.b16 %v172, %v171
      %vm177 = vcmask 31744
      %v179 = vsel %vm177, %v173, 0
      %v182 = vsel %vm177, %v174, 0
      %v185 = vsel %vm177, %v175, 0
      %v188 = vsel %vm177, %v176, 0
      %vm190 = vcmask 1041408
      %v192 = vsel %vm190, %v156, 0
      %194 = vmatprep.subr.bf16.mxu0 0
      %195 = vmatpush1.bf16.msra.mxu0 %v192
      %196 = vmatprep.subr.bf16.mxu0 0
      %197 = vmatpush1.bf16.msra.mxu0 0
      %198 = vmatprep.subr.bf16.mxu0 0
      %199 = vmatpush1.bf16.msra.mxu0 0
      %200 = vmatprep.subr.bf16.mxu0 0
      %201 = vmatpush1.bf16.msra.mxu0 0
      %202 = vmatprep.subr.bf16.mxu0 0
      %203 = vmatpush1.bf16.msra.mxu0 0
      %204 = vmatprep.subr.bf16.mxu0 0
      %205 = vmatpush1.bf16.msra.mxu0 0
      %206 = vmatprep.subr.bf16.mxu0 0
      %207 = vmatpush1.bf16.msra.mxu0 0
      %208 = vmatprep.subr.bf16.mxu0 0
      %209 = vmatpush1.bf16.msra.mxu0 0
      %210 = vmatprep.subr.bf16.mxu0 0
      %211 = vmatpush1.bf16.msra.mxu0 0
      %212 = vmatprep.subr.bf16.mxu0 0
      %213 = vmatpush1.bf16.msra.mxu0 0
      %214 = vmatprep.subr.bf16.mxu0 0
      %215 = vmatpush1.bf16.msra.mxu0 0
      %216 = vmatprep.subr.bf16.mxu0 0
      %217 = vmatpush1.bf16.msra.mxu0 0
      %218 = vmatprep.subr.bf16.mxu0 0
      %219 = vmatpush1.bf16.msra.mxu0 0
      %220 = vmatprep.subr.bf16.mxu0 0
      %221 = vmatpush1.bf16.msra.mxu0 0
      %222 = vmatprep.subr.bf16.mxu0 0
      %223 = vmatpush1.bf16.msra.mxu0 0
      %224 = vmatprep.subr.bf16.mxu0 0
      %225 = vmatpush1.bf16.msra.mxu0 0
      %226 = vmatprep.mubr.bf16.mxu0 0
      %227 = vmatmul.mubr.bf16.gmra.mrb[0].mxu0 %v179
      %v228 = vpop.f32.mrb[0].mxu0
      %v229 = vadd.f32 0.0, %v228
      %v230 = vpop.f32.mrb[0].mxu0
      %v231 = vpop.f32.mrb[0].mxu0
      %v232 = vadd.f32 0.0, %v231
      %v233 = vpop.f32.mrb[0].mxu0
      %234 = vmatprep.mubr.bf16.mxu0 0
      %235 = vmatmul.mubr.bf16.gmra.mrb[0].mxu0 %v182
      %v236 = vpop.f32.mrb[0].mxu0
      %v237 = vadd.f32 0.0, %v236
      %v238 = vpop.f32.mrb[0].mxu0
      %v239 = vpop.f32.mrb[0].mxu0
      %v240 = vadd.f32 0.0, %v239
      %v241 = vpop.f32.mrb[0].mxu0
      %242 = vmatprep.mubr.bf16.mxu0 0
      %243 = vmatmul.mubr.bf16.gmra.mrb[0].mxu0 %v185
      %v244 = vpop.f32.mrb[0].mxu0
      %v245 = vadd.f32 0.0, %v244
      %v246 = vpop.f32.mrb[0].mxu0
      %v247 = vpop.f32.mrb[0].mxu0
      %v248 = vadd.f32 0.0, %v247
      %v249 = vpop.f32.mrb[0].mxu0
      %250 = vmatprep.mubr.bf16.mxu0 0
      %251 = vmatmul.mubr.bf16.gmra.mrb[0].mxu0 %v188
      %v252 = vpop.f32.mrb[0].mxu0
      %v253 = vadd.f32 0.0, %v252
      %v254 = vpop.f32.mrb[0].mxu0
      %v255 = vpop.f32.mrb[0].mxu0
      %v256 = vadd.f32 0.0, %v255
      %v257 = vpop.f32.mrb[0].mxu0
      %258 = vdwg.mxu0
      %vm259 = vcmask 64512
      %260 = vst.msk [vmem:[%s145] sm:$0xff] %vm259, %v229
      %261 = vst.msk [vmem:[%s145 + $0x8] sm:$0xff] %vm259, %v232
      %262 = vst.msk [vmem:[%s145 + $0x10] sm:$0xff] %vm259, %v237
      %263 = vst.msk [vmem:[%s145 + $0x18] sm:$0xff] %vm259, %v240
      %264 = vst.msk [vmem:[%s145 + $0x20] sm:$0xff] %vm259, %v245
      %265 = vst.msk [vmem:[%s145 + $0x28] sm:$0xff] %vm259, %v248
      %266 = vst.msk [vmem:[%s145 + $0x30] sm:$0xff] %vm259, %v253
      %267 = vst.msk [vmem:[%s145 + $0x38] sm:$0xff] %vm259, %v256
      %s268 = smul.u32 8, %s13
      %p269 = scmp.lt.s32.totalorder %s268, 15
      %s270 = scalar_select %p269, %s268, 15
      %s271 = smul.addr %s270, 8
      %s272 = scalar_lea.vmem %s2, %s271
      // Predicated region
      $region29: #{_lambda_.5} parent=27 // pred_check
        %p273 = pneg %p78
      $region30: #{_lambda_.5} parent=27 // pred_check_branch
        %275 = sbr.rel (%p273) target = $region32
      $region31: #{_lambda_.5} parent=27 // pred_region
        %s276 = smul.u32 8, %s13
      $region32: #{_lambda_.5} parent=27 // pred_fallthru
        _
    $region28: #{_lambda_.5} parent=5 // pred_fallthru
      _
    %p277 = scmp.le.s32.totalorder 2, %s8
    // Predicated region
    $region33: #{_lambda_.5} parent=5 // pred_check
      %p278 = pneg %p277
    $region34: #{_lambda_.5} parent=5 // pred_check_branch
      %280 = sbr.rel (%p278) target = $region36
    $region35: #{_lambda_.5} parent=5 // pred_region
      %s281 = ssub.s32 %s8, 2
      // Predicated region
      $region37: #{_lambda_.5} parent=35 // pred_check
        %p282 = pneg %p84
      $region38: #{_lambda_.5} parent=35 // pred_check_branch
        %284 = sbr.rel (%p282) target = $region40
      $region39: #{_lambda_.5} parent=35 // pred_region
        %s285 = smul.u32 8, %s14
        %p286 = scmp.lt.s32.totalorder %s285, 15
        %s287 = scalar_select %p286, %s285, 15
        %s288 = smul.addr %s287, 8
        %s289 = scalar_lea.vmem %s2, %s288
      $region40: #{_lambda_.5} parent=35 // pred_fallthru
        _
    $region36: #{_lambda_.5} parent=5 // pred_fallthru
      _
  $region6: #{_lambda_.5} parent=0 // loop_footer
    %s12 = sadd.s32 1, %s8
  $region7: #{_lambda_.5} parent=0 // loop_footer_branch
    %7 = sbr.rel target = $region3
  $region8: #{_lambda_.5} parent=0 // loop_exit
    _

// kernel: _lambda_.6
$region0: #{_lambda_.6}
  #allocation0 [shape = 'u32[]', space=smem, size = 0x4, offset = 0x4, fixed_abs, tag = 'smem constant byte address 0x4 - core index']
  #allocation1 [shape = 'u32[144,128]{1,0:T(1,128)}', space=vmem, size = 0x12000, scoped, tag = 'internal scratch']
  %s0 = inlined_call_operand.vmem [shape: bf16[128,36], index: 0, kind: input, shape index: {}]
  %s1 = inlined_call_operand.vmem [shape: bf16[36,8], index: 1, kind: input, shape index: {}]
  %s2 = inlined_call_operand.vmem [shape: f32[1,8], index: 2, kind: input, shape index: {}]
  %s3 = inlined_call_operand.vmem [shape: f32[1,8], index: 3, kind: input, shape index: {}]
  %s4 = inlined_call_operand.vmem [shape: bf16[128,8], index: 4, kind: output, shape index: {}]
  %s5 = sld [smem:[#allocation0]]
  $region49: #{_lambda_.6} parent=0
    _
  %s7 = ssub.s32 1, %s5
  %s8 = scalar_select 0, %s7, %s5
  loop: start=0, step=1, limit=4
  $region2: #{_lambda_.6} parent=0 // loop_pre_header
    _
  $region3: #{_lambda_.6} parent=0 // loop_header
    %s10 = sphi 0, %s14
    %p11 = scmp.ge.s32.totalorder %s10, 4
    %s20 = sphi 0, %s22
    %s23 = sphi 0, %s20
    %s24 = sphi 0, %s23
    %s40 = sphi 0, %s24
    %s44 = sphi 0, %s44
    %s46 = sphi 0, %s44
    %s47 = sphi 0, %s46
    %s61 = sphi 0, %s47
    %s65 = sphi 0, %s65
    %s67 = sphi 0, %s65
    %s68 = sphi 0, %s67
    %s82 = sphi 0, %s68
    %s86 = sphi 0, %s86
    %s88 = sphi 0, %s86
    %s89 = sphi 0, %s88
    %s103 = sphi 0, %s89
    %s109 = sphi 0, %s111
    %s112 = sphi 0, %s109
    %s113 = sphi 0, %s112
    %s129 = sphi 0, %s113
  $region4: #{_lambda_.6} parent=0 // loop_header_branch
    %13 = sbr.rel (%p11) target = $region8
  $region5: #{_lambda_.6} parent=0 // loop_body
    %s15 = ssub.s32 %s10, 1
    %s16 = ssub.s32 %s10, 2
    %s17 = sadd.s32 %s10, 1
    %s18 = ssub.s32 %s10, %s17
    %p19 = scmp.eq.s32.totalorder %s18, 0
    %s21 = sadd.s32 %s20, 1
    %s22 = scalar_select %p19, %s20, %s21
    %p25 = pneg %p19
    %p26 = scmp.eq.s32.totalorder %s10, 1
    %p27 = por %p25, %p26
    %p28 = scmp.ne.s32.totalorder %s20, %s23
    %p29 = scmp.eq.s32.totalorder %s10, 0
    %p30 = por %p28, %p29
    %p31 = scmp.ne.s32.totalorder %s20, %s23
    %p32 = scmp.eq.s32.totalorder %s15, 1
    %p33 = por %p31, %p32
    %p34 = scmp.ne.s32.totalorder %s23, %s24
    %p35 = scmp.eq.s32.totalorder %s15, 0
    %p36 = por %p34, %p35
    %p37 = scmp.ne.s32.totalorder %s23, %s24
    %p38 = scmp.eq.s32.totalorder %s16, 1
    %p39 = por %p37, %p38
    %p41 = scmp.ne.s32.totalorder %s24, %s40
    %p42 = scmp.eq.s32.totalorder %s16, 0
    %p43 = por %p41, %p42
    %s45 = sadd.s32 %s44, 1
    %p48 = scmp.eq.s32.totalorder %s10, 1
    %p49 = scmp.ne.s32.totalorder %s44, %s46
    %p50 = scmp.eq.s32.totalorder %s10, 0
    %p51 = por %p49, %p50
    %p52 = scmp.ne.s32.totalorder %s44, %s46
    %p53 = scmp.eq.s32.totalorder %s15, 1
    %p54 = por %p52, %p53
    %p55 = scmp.ne.s32.totalorder %s46, %s47
    %p56 = scmp.eq.s32.totalorder %s15, 0
    %p57 = por %p55, %p56
    %p58 = scmp.ne.s32.totalorder %s46, %s47
    %p59 = scmp.eq.s32.totalorder %s16, 1
    %p60 = por %p58, %p59
    %p62 = scmp.ne.s32.totalorder %s47, %s61
    %p63 = scmp.eq.s32.totalorder %s16, 0
    %p64 = por %p62, %p63
    %s66 = sadd.s32 %s65, 1
    %p69 = scmp.eq.s32.totalorder %s10, 1
    %p70 = scmp.ne.s32.totalorder %s65, %s67
    %p71 = scmp.eq.s32.totalorder %s10, 0
    %p72 = por %p70, %p71
    %p73 = scmp.ne.s32.totalorder %s65, %s67
    %p74 = scmp.eq.s32.totalorder %s15, 1
    %p75 = por %p73, %p74
    %p76 = scmp.ne.s32.totalorder %s67, %s68
    %p77 = scmp.eq.s32.totalorder %s15, 0
    %p78 = por %p76, %p77
    %p79 = scmp.ne.s32.totalorder %s67, %s68
    %p80 = scmp.eq.s32.totalorder %s16, 1
    %p81 = por %p79, %p80
    %p83 = scmp.ne.s32.totalorder %s68, %s82
    %p84 = scmp.eq.s32.totalorder %s16, 0
    %p85 = por %p83, %p84
    %s87 = sadd.s32 %s86, 1
    %p90 = scmp.eq.s32.totalorder %s10, 1
    %p91 = scmp.ne.s32.totalorder %s86, %s88
    %p92 = scmp.eq.s32.totalorder %s10, 0
    %p93 = por %p91, %p92
    %p94 = scmp.ne.s32.totalorder %s86, %s88
    %p95 = scmp.eq.s32.totalorder %s15, 1
    %p96 = por %p94, %p95
    %p97 = scmp.ne.s32.totalorder %s88, %s89
    %p98 = scmp.eq.s32.totalorder %s15, 0
    %p99 = por %p97, %p98
    %p100 = scmp.ne.s32.totalorder %s88, %s89
    %p101 = scmp.eq.s32.totalorder %s16, 1
    %p102 = por %p100, %p101
    %p104 = scmp.ne.s32.totalorder %s89, %s103
    %p105 = scmp.eq.s32.totalorder %s16, 0
    %p106 = por %p104, %p105
    %s107 = ssub.s32 %s10, %s17
    %p108 = scmp.eq.s32.totalorder %s107, 0
    %s110 = sadd.s32 %s109, 1
    %s111 = scalar_select %p108, %s109, %s110
    %p114 = pneg %p108
    %p115 = scmp.eq.s32.totalorder %s10, 1
    %p116 = por %p114, %p115
    %p117 = scmp.ne.s32.totalorder %s109, %s112
    %p118 = scmp.eq.s32.totalorder %s10, 0
    %p119 = por %p117, %p118
    %p120 = scmp.ne.s32.totalorder %s109, %s112
    %p121 = scmp.eq.s32.totalorder %s15, 1
    %p122 = por %p120, %p121
    %p123 = scmp.ne.s32.totalorder %s112, %s113
    %p124 = scmp.eq.s32.totalorder %s15, 0
    %p125 = por %p123, %p124
    %p126 = scmp.ne.s32.totalorder %s112, %s113
    %p127 = scmp.eq.s32.totalorder %s16, 1
    %p128 = por %p126, %p127
    %p130 = scmp.ne.s32.totalorder %s113, %s129
    %p131 = scmp.eq.s32.totalorder %s16, 0
    %p132 = por %p130, %p131
    %p133 = scmp.le.s32.totalorder 1, %s10
    %p134 = scmp.lt.s32.totalorder %s10, 3
    %p135 = pnand %p133, %p134
    %p136 = pneg %p135
    // Predicated region
    $region9: #{_lambda_.6} parent=5 // pred_check
      _
    $region10: #{_lambda_.6} parent=5 // pred_check_branch
      %138 = sbr.rel (%p135) target = $region12
    $region11: #{_lambda_.6} parent=5 // pred_region
      %s139 = ssub.s32 %s10, 1
      // Predicated region
      $region13: #{_lambda_.6} parent=11 // pred_check
        %p140 = pneg %p57
      $region14: #{_lambda_.6} parent=11 // pred_check_branch
        %142 = sbr.rel (%p140) target = $region16
      $region15: #{_lambda_.6} parent=11 // pred_region
        _
      $region16: #{_lambda_.6} parent=11 // pred_fallthru
        _
      // Predicated region
      $region17: #{_lambda_.6} parent=11 // pred_check
        %p143 = pneg %p78
      $region18: #{_lambda_.6} parent=11 // pred_check_branch
        %145 = sbr.rel (%p143) target = $region20
      $region19: #{_lambda_.6} parent=11 // pred_region
        _
      $region20: #{_lambda_.6} parent=11 // pred_fallthru
        _
      // Predicated region
      $region21: #{_lambda_.6} parent=11 // pred_check
        %p146 = pneg %p99
      $region22: #{_lambda_.6} parent=11 // pred_check_branch
        %148 = sbr.rel (%p146) target = $region24
      $region23: #{_lambda_.6} parent=11 // pred_region
        _
      $region24: #{_lambda_.6} parent=11 // pred_fallthru
        _
    $region12: #{_lambda_.6} parent=5 // pred_fallthru
      _
    %p149 = scmp.lt.s32.totalorder %s10, 2
    // Predicated region
    $region25: #{_lambda_.6} parent=5 // pred_check
      %p150 = pneg %p149
    $region26: #{_lambda_.6} parent=5 // pred_check_branch
      %152 = sbr.rel (%p150) target = $region28
    $region27: #{_lambda_.6} parent=5 // pred_region
      // Predicated region
      $region29: #{_lambda_.6} parent=27 // pred_check
        %p153 = pneg %p30
      $region30: #{_lambda_.6} parent=27 // pred_check_branch
        %155 = sbr.rel (%p153) target = $region32
      $region31: #{_lambda_.6} parent=27 // pred_region
        %s156 = smul.u32 8, %s10
        %p157 = scmp.lt.s32.totalorder %s156, 15
        %s158 = scalar_select %p157, %s156, 15
        %s159 = smul.addr %s158, 4
        %s160 = scalar_lea.vmem %s0, %s159
        %s161 = smul.u32 8, %s10
      $region32: #{_lambda_.6} parent=27 // pred_fallthru
        _
    $region28: #{_lambda_.6} parent=5 // pred_fallthru
      _
    %p162 = scmp.le.s32.totalorder 1, %s10
    %p163 = scmp.lt.s32.totalorder %s10, 3
    %p164 = pnand %p162, %p163
    %p165 = pneg %p164
    // Predicated region
    $region33: #{_lambda_.6} parent=5 // pred_check
      _
    $region34: #{_lambda_.6} parent=5 // pred_check_branch
      %167 = sbr.rel (%p164) target = $region36
    $region35: #{_lambda_.6} parent=5 // pred_region
      %s168 = ssub.s32 %s10, 1
      %s169 = smul.u32 8, %s15
      %p170 = scmp.lt.s32.totalorder %s169, 15
      %s171 = scalar_select %p170, %s169, 15
      %s172 = smul.addr %s171, 4
      %s173 = scalar_lea.vmem %s0, %s172
      %p174 = pneg %p36
      %p175 = pneg %p33
      %p176 = pneg %p57
      %p177 = pneg %p54
      %p178 = pneg %p78
      %p179 = pneg %p75
      %p180 = pneg %p99
      %p181 = pneg %p96
      %p182 = pneg %p125
      %p183 = pneg %p122
      %s184 = smul.u32 8, %s15
      %p185 = scmp.lt.s32.totalorder %s184, 15
      %s186 = scalar_select %p185, %s184, 15
      %s187 = smul.addr %s186, 4
      %s188 = scalar_lea.vmem %s4, %s187
      %s189 = smul.u32 8, %s15
      %p190 = scmp.lt.s32.totalorder %s189, 15
      %s191 = scalar_select %p190, %s189, 15
      %s192 = smul.addr %s191, 4
      %s193 = scalar_lea.vmem %s0, %s192
      %s194 = smul.u32 8, %s15
      %s195 = smul.u32 8, %s15
      %p196 = scmp.lt.s32.totalorder %s195, 15
      %s197 = scalar_select %p196, %s195, 15
      %s198 = smul.addr %s197, 4
      %s199 = scalar_lea.vmem %s4, %s198
      %s200 = smul.u32 8, %s15
      %v202 = vld [vmem:[%s193] sm:$0xf]
      %v203 = vld [vmem:[%s193 + $0x4] sm:$0xf]
      %v204 = vld [vmem:[%s193 + $0x8] sm:$0xf]
      %v205 = vld [vmem:[%s193 + $0xc] sm:$0xf]
      %v206 = vld [vmem:[%s193 + $0x10] sm:$0xf]
      %v207 = vld [vmem:[%s193 + $0x14] sm:$0xf]
      %v208 = vld [vmem:[%s193 + $0x18] sm:$0xf]
      %v209 = vld [vmem:[%s193 + $0x1c] sm:$0xf]
      %v210 = vld [vmem:[%s1] sm:$0xf]
      %v211 = vld [vmem:[%s1 + $0x4] sm:$0xf]
      %v212 = vld [vmem:[%s1 + $0x8] sm:$0xf]
      %v213 = vld [vmem:[%s1 + $0xc] sm:$0xf]
      %v214 = vld [vmem:[%s1 + $0x10] sm:$0x3]
      %v223 = vunpack.c.l.b16 %v202
      %v224 = vunpack.c.l.b16 %v203
      %v225 = vunpack.c.l.b16 %v204
      %v226 = vunpack.c.l.b16 %v205
      %v227 = vunpack.c.l.b16 %v206
      %v228 = vunpack.c.l.b16 %v207
      %v229 = vunpack.c.l.b16 %v208
      %v230 = vunpack.c.l.b16 %v209
      %v231 = vpack.c.b16 %v224, %v223
      %v232 = vpack.c.b16 %v226, %v225
      %v233 = vpack.c.b16 %v228, %v227
      %v234 = vpack.c.b16 %v230, %v229
      %v240 = vunpack.c.l.b16 %v210
      %v241 = vunpack.c.l.b16 %v211
      %v242 = vunpack.c.l.b16 %v212
      %v243 = vunpack.c.l.b16 %v213
      %v244 = vunpack.c.l.b16 %v214
      %v245 = vpack.c.b16 %v241, %v240
      %v246 = vpack.c.b16 %v243, %v242
      %v247 = vpack.c.b16 %v244, %v244
      %vm250 = vcmask 293888
      %v252 = vsel %vm250, %v231, 0
      %v255 = vsel %vm250, %v232, 0
      %v258 = vsel %vm250, %v233, 0
      %v261 = vsel %vm250, %v234, 0
      %vm263 = vcmask 1041408
      %v265 = vsel %vm263, %v247, 0
      %267 = vmatprep.subr.bf16.mxu0 0
      %268 = vmatpush1.bf16.msra.mxu0 %v245
      %269 = vmatprep.subr.bf16.mxu0 0
      %270 = vmatpush1.bf16.msra.mxu0 %v246
      %271 = vmatprep.subr.bf16.mxu0 0
      %272 = vmatpush1.bf16.msra.mxu0 %v265
      %273 = vmatprep.subr.bf16.mxu0 0
      %274 = vmatpush1.bf16.msra.mxu0 0
      %275 = vmatprep.subr.bf16.mxu0 0
      %276 = vmatpush1.bf16.msra.mxu0 0
      %277 = vmatprep.subr.bf16.mxu0 0
      %278 = vmatpush1.bf16.msra.mxu0 0
      %279 = vmatprep.subr.bf16.mxu0 0
      %280 = vmatpush1.bf16.msra.mxu0 0
      %281 = vmatprep.subr.bf16.mxu0 0
      %282 = vmatpush1.bf16.msra.mxu0 0
      %283 = vmatprep.subr.bf16.mxu0 0
      %284 = vmatpush1.bf16.msra.mxu0 0
      %285 = vmatprep.subr.bf16.mxu0 0
      %286 = vmatpush1.bf16.msra.mxu0 0
      %287 = vmatprep.subr.bf16.mxu0 0
      %288 = vmatpush1.bf16.msra.mxu0 0
      %289 = vmatprep.subr.bf16.mxu0 0
      %290 = vmatpush1.bf16.msra.mxu0 0
      %291 = vmatprep.subr.bf16.mxu0 0
      %292 = vmatpush1.bf16.msra.mxu0 0
      %293 = vmatprep.subr.bf16.mxu0 0
      %294 = vmatpush1.bf16.msra.mxu0 0
      %295 = vmatprep.subr.bf16.mxu0 0
      %296 = vmatpush1.bf16.msra.mxu0 0
      %297 = vmatprep.subr.bf16.mxu0 0
      %298 = vmatpush1.bf16.msra.mxu0 0
      %299 = vmatprep.mubr.bf16.mxu0 0
      %300 = vmatmul.mubr.bf16.gmra.mrb[0].mxu0 %v252
      %v301 = vpop.f32.mrb[0].mxu0
      %v302 = vadd.f32 0.0, %v301
      %v303 = vpop.f32.mrb[0].mxu0
      %v304 = vpop.f32.mrb[0].mxu0
      %v305 = vadd.f32 0.0, %v304
      %v306 = vpop.f32.mrb[0].mxu0
      %307 = vmatprep.mubr.bf16.mxu0 0
      %308 = vmatmul.mubr.bf16.gmra.mrb[0].mxu0 %v255
      %v309 = vpop.f32.mrb[0].mxu0
      %v310 = vadd.f32 0.0, %v309
      %v311 = vpop.f32.mrb[0].mxu0
      %v312 = vpop.f32.mrb[0].mxu0
      %v313 = vadd.f32 0.0, %v312
      %v314 = vpop.f32.mrb[0].mxu0
      %315 = vmatprep.mubr.bf16.mxu0 0
      %316 = vmatmul.mubr.bf16.gmra.mrb[0].mxu0 %v258
      %v317 = vpop.f32.mrb[0].mxu0
      %v318 = vadd.f32 0.0, %v317
      %v319 = vpop.f32.mrb[0].mxu0
      %v320 = vpop.f32.mrb[0].mxu0
      %v321 = vadd.f32 0.0, %v320
      %v322 = vpop.f32.mrb[0].mxu0
      %323 = vmatprep.mubr.bf16.mxu0 0
      %324 = vmatmul.mubr.bf16.gmra.mrb[0].mxu0 %v261
      %v325 = vpop.f32.mrb[0].mxu0
      %v326 = vadd.f32 0.0, %v325
      %v327 = vpop.f32.mrb[0].mxu0
      %v328 = vpop.f32.mrb[0].mxu0
      %v329 = vadd.f32 0.0, %v328
      %v330 = vpop.f32.mrb[0].mxu0
      %331 = vdwg.mxu0
      %v332 = vld [vmem:[%s2] sm:$0x1]
      %v334 = vlaneseq
      %v335 = vshrl.u32 %v334, 7
      %v336 = vsub.s32 0, %v335
      %v337 = vrot.slane %v332, %v336
      %v339 = vmul.f32 %v302, %v337
      %v340 = vmul.f32 %v305, %v337
      %v341 = vmul.f32 %v310, %v337
      %v342 = vmul.f32 %v313, %v337
      %v343 = vmul.f32 %v318, %v337
      %v344 = vmul.f32 %v321, %v337
      %v345 = vmul.f32 %v326, %v337
      %v346 = vmul.f32 %v329, %v337
      %v347 = vld [vmem:[%s3] sm:$0x1]
      %v349 = vlaneseq
      %v350 = vshrl.u32 %v349, 7
      %v351 = vsub.s32 0, %v350
      %v352 = vrot.slane %v347, %v351
      %v354 = vadd.f32 %v339, %v352
      %v355 = vadd.f32 %v340, %v352
      %v356 = vadd.f32 %v341, %v352
      %v357 = vadd.f32 %v342, %v352
      %v358 = vadd.f32 %v343, %v352
      %v359 = vadd.f32 %v344, %v352
      %v360 = vadd.f32 %v345, %v352
      %v361 = vadd.f32 %v346, %v352
      %vm362 = vcmp.gt.f32.partialorder %v354, 0.0
      %vm363 = vcmp.gt.f32.partialorder %v355, 0.0
      %vm364 = vcmp.gt.f32.partialorder %v356, 0.0
      %vm365 = vcmp.gt.f32.partialorder %v357, 0.0
      %vm366 = vcmp.gt.f32.partialorder %v358, 0.0
      %vm367 = vcmp.gt.f32.partialorder %v359, 0.0
      %vm368 = vcmp.gt.f32.partialorder %v360, 0.0
      %vm369 = vcmp.gt.f32.partialorder %v361, 0.0
      %v370 = vmul.f32 %v354, 0.1
      %v371 = vmul.f32 %v355, 0.1
      %v372 = vmul.f32 %v356, 0.1
      %v373 = vmul.f32 %v357, 0.1
      %v374 = vmul.f32 %v358, 0.1
      %v375 = vmul.f32 %v359, 0.1
      %v376 = vmul.f32 %v360, 0.1
      %v377 = vmul.f32 %v361, 0.1
      %v378 = vsel %vm362, %v354, %v370
      %v379 = vsel %vm363, %v355, %v371
      %v380 = vsel %vm364, %v356, %v372
      %v381 = vsel %vm365, %v357, %v373
      %v382 = vsel %vm366, %v358, %v374
      %v383 = vsel %vm367, %v359, %v375
      %v384 = vsel %vm368, %v360, %v376
      %v385 = vsel %vm369, %v361, %v377
      %v386 = vpack.c.bf16 %v379, %v378
      %v387 = vpack.c.bf16 %v381, %v380
      %v388 = vpack.c.bf16 %v383, %v382
      %v389 = vpack.c.bf16 %v385, %v384
      %v394 = vunpack.c.l.b16 %v386
      %v395 = vunpack.c.h.b16 %v386
      %v396 = vunpack.c.l.b16 %v387
      %v397 = vunpack.c.h.b16 %v387
      %v398 = vunpack.c.l.b16 %v388
      %v399 = vunpack.c.h.b16 %v388
      %v400 = vunpack.c.l.b16 %v389
      %v401 = vunpack.c.h.b16 %v389
      %v402 = vpack.c.b16 %v394, %v394
      %v403 = vpack.c.b16 %v395, %v395
      %v404 = vpack.c.b16 %v396, %v396
      %v405 = vpack.c.b16 %v397, %v397
      %v406 = vpack.c.b16 %v398, %v398
      %v407 = vpack.c.b16 %v399, %v399
      %v408 = vpack.c.b16 %v400, %v400
      %v409 = vpack.c.b16 %v401, %v401
      %vm418 = vcmask 60416
      %419 = vst.msk [vmem:[%s199] sm:$0xf] %vm418, %v402
      %420 = vst.msk [vmem:[%s199 + $0x4] sm:$0xf] %vm418, %v403
      %421 = vst.msk [vmem:[%s199 + $0x8] sm:$0xf] %vm418, %v404
      %422 = vst.msk [vmem:[%s199 + $0xc] sm:$0xf] %vm418, %v405
      %423 = vst.msk [vmem:[%s199 + $0x10] sm:$0xf] %vm418, %v406
      %424 = vst.msk [vmem:[%s199 + $0x14] sm:$0xf] %vm418, %v407
      %425 = vst.msk [vmem:[%s199 + $0x18] sm:$0xf] %vm418, %v408
      %426 = vst.msk [vmem:[%s199 + $0x1c] sm:$0xf] %vm418, %v409
      %s427 = smul.u32 8, %s15
      %p428 = scmp.lt.s32.totalorder %s427, 15
      %s429 = scalar_select %p428, %s427, 15
      %s430 = smul.addr %s429, 4
      %s431 = scalar_lea.vmem %s4, %s430
      // Predicated region
      $region37: #{_lambda_.6} parent=35 // pred_check
        %p432 = pneg %p122
      $region38: #{_lambda_.6} parent=35 // pred_check_branch
        %434 = sbr.rel (%p432) target = $region40
      $region39: #{_lambda_.6} parent=35 // pred_region
        %s435 = smul.u32 8, %s15
      $region40: #{_lambda_.6} parent=35 // pred_fallthru
        _
    $region36: #{_lambda_.6} parent=5 // pred_fallthru
      _
    %p436 = scmp.le.s32.totalorder 2, %s10
    // Predicated region
    $region41: #{_lambda_.6} parent=5 // pred_check
      %p437 = pneg %p436
    $region42: #{_lambda_.6} parent=5 // pred_check_branch
      %439 = sbr.rel (%p437) target = $region44
    $region43: #{_lambda_.6} parent=5 // pred_region
      %s440 = ssub.s32 %s10, 2
      // Predicated region
      $region45: #{_lambda_.6} parent=43 // pred_check
        %p441 = pneg %p128
      $region46: #{_lambda_.6} parent=43 // pred_check_branch
        %443 = sbr.rel (%p441) target = $region48
      $region47: #{_lambda_.6} parent=43 // pred_region
        %s444 = smul.u32 8, %s16
        %p445 = scmp.lt.s32.totalorder %s444, 15
        %s446 = scalar_select %p445, %s444, 15
        %s447 = smul.addr %s446, 4
        %s448 = scalar_lea.vmem %s4, %s447
      $region48: #{_lambda_.6} parent=43 // pred_fallthru
        _
    $region44: #{_lambda_.6} parent=5 // pred_fallthru
      _
  $region6: #{_lambda_.6} parent=0 // loop_footer
    %s14 = sadd.s32 1, %s10
  $region7: #{_lambda_.6} parent=0 // loop_footer_branch
    %9 = sbr.rel target = $region3
  $region8: #{_lambda_.6} parent=0 // loop_exit
    _

// kernel: _lambda_.7
$region0: #{_lambda_.7}
  #allocation0 [shape = 'u32[]', space=smem, size = 0x4, offset = 0x4, fixed_abs, tag = 'smem constant byte address 0x4 - core index']
  #allocation1 [shape = 'u32[144,128]{1,0:T(1,128)}', space=vmem, size = 0x12000, scoped, tag = 'internal scratch']
  %s0 = inlined_call_operand.vmem [shape: bf16[128,72], index: 0, kind: input, shape index: {}]
  %s1 = inlined_call_operand.vmem [shape: bf16[72,8], index: 1, kind: input, shape index: {}]
  %s2 = inlined_call_operand.vmem [shape: f32[128,8], index: 2, kind: input, shape index: {}]
  %s3 = inlined_call_operand.vmem [shape: f32[128,8], index: 3, kind: output, shape index: {}]
  %s4 = sld [smem:[#allocation0]]
  $region45: #{_lambda_.7} parent=0
    _
  %s6 = ssub.s32 1, %s4
  %s7 = scalar_select 0, %s6, %s4
  loop: start=0, step=1, limit=4
  $region2: #{_lambda_.7} parent=0 // loop_pre_header
    _
  $region3: #{_lambda_.7} parent=0 // loop_header
    %s9 = sphi 0, %s13
    %p10 = scmp.ge.s32.totalorder %s9, 4
    %s19 = sphi 0, %s21
    %s22 = sphi 0, %s19
    %s23 = sphi 0, %s22
    %s39 = sphi 0, %s23
    %s43 = sphi 0, %s43
    %s45 = sphi 0, %s43
    %s46 = sphi 0, %s45
    %s60 = sphi 0, %s46
    %s66 = sphi 0, %s68
    %s69 = sphi 0, %s66
    %s70 = sphi 0, %s69
    %s86 = sphi 0, %s70
    %s92 = sphi 0, %s94
    %s95 = sphi 0, %s92
    %s96 = sphi 0, %s95
    %s112 = sphi 0, %s96
  $region4: #{_lambda_.7} parent=0 // loop_header_branch
    %12 = sbr.rel (%p10) target = $region8
  $region5: #{_lambda_.7} parent=0 // loop_body
    %s14 = ssub.s32 %s9, 1
    %s15 = ssub.s32 %s9, 2
    %s16 = sadd.s32 %s9, 1
    %s17 = ssub.s32 %s9, %s16
    %p18 = scmp.eq.s32.totalorder %s17, 0
    %s20 = sadd.s32 %s19, 1
    %s21 = scalar_select %p18, %s19, %s20
    %p24 = pneg %p18
    %p25 = scmp.eq.s32.totalorder %s9, 1
    %p26 = por %p24, %p25
    %p27 = scmp.ne.s32.totalorder %s19, %s22
    %p28 = scmp.eq.s32.totalorder %s9, 0
    %p29 = por %p27, %p28
    %p30 = scmp.ne.s32.totalorder %s19, %s22
    %p31 = scmp.eq.s32.totalorder %s14, 1
    %p32 = por %p30, %p31
    %p33 = scmp.ne.s32.totalorder %s22, %s23
    %p34 = scmp.eq.s32.totalorder %s14, 0
    %p35 = por %p33, %p34
    %p36 = scmp.ne.s32.totalorder %s22, %s23
    %p37 = scmp.eq.s32.totalorder %s15, 1
    %p38 = por %p36, %p37
    %p40 = scmp.ne.s32.totalorder %s23, %s39
    %p41 = scmp.eq.s32.totalorder %s15, 0
    %p42 = por %p40, %p41
    %s44 = sadd.s32 %s43, 1
    %p47 = scmp.eq.s32.totalorder %s9, 1
    %p48 = scmp.ne.s32.totalorder %s43, %s45
    %p49 = scmp.eq.s32.totalorder %s9, 0
    %p50 = por %p48, %p49
    %p51 = scmp.ne.s32.totalorder %s43, %s45
    %p52 = scmp.eq.s32.totalorder %s14, 1
    %p53 = por %p51, %p52
    %p54 = scmp.ne.s32.totalorder %s45, %s46
    %p55 = scmp.eq.s32.totalorder %s14, 0
    %p56 = por %p54, %p55
    %p57 = scmp.ne.s32.totalorder %s45, %s46
    %p58 = scmp.eq.s32.totalorder %s15, 1
    %p59 = por %p57, %p58
    %p61 = scmp.ne.s32.totalorder %s46, %s60
    %p62 = scmp.eq.s32.totalorder %s15, 0
    %p63 = por %p61, %p62
    %s64 = ssub.s32 %s9, %s16
    %p65 = scmp.eq.s32.totalorder %s64, 0
    %s67 = sadd.s32 %s66, 1
    %s68 = scalar_select %p65, %s66, %s67
    %p71 = pneg %p65
    %p72 = scmp.eq.s32.totalorder %s9, 1
    %p73 = por %p71, %p72
    %p74 = scmp.ne.s32.totalorder %s66, %s69
    %p75 = scmp.eq.s32.totalorder %s9, 0
    %p76 = por %p74, %p75
    %p77 = scmp.ne.s32.totalorder %s66, %s69
    %p78 = scmp.eq.s32.totalorder %s14, 1
    %p79 = por %p77, %p78
    %p80 = scmp.ne.s32.totalorder %s69, %s70
    %p81 = scmp.eq.s32.totalorder %s14, 0
    %p82 = por %p80, %p81
    %p83 = scmp.ne.s32.totalorder %s69, %s70
    %p84 = scmp.eq.s32.totalorder %s15, 1
    %p85 = por %p83, %p84
    %p87 = scmp.ne.s32.totalorder %s70, %s86
    %p88 = scmp.eq.s32.totalorder %s15, 0
    %p89 = por %p87, %p88
    %s90 = ssub.s32 %s9, %s16
    %p91 = scmp.eq.s32.totalorder %s90, 0
    %s93 = sadd.s32 %s92, 1
    %s94 = scalar_select %p91, %s92, %s93
    %p97 = pneg %p91
    %p98 = scmp.eq.s32.totalorder %s9, 1
    %p99 = por %p97, %p98
    %p100 = scmp.ne.s32.totalorder %s92, %s95
    %p101 = scmp.eq.s32.totalorder %s9, 0
    %p102 = por %p100, %p101
    %p103 = scmp.ne.s32.totalorder %s92, %s95
    %p104 = scmp.eq.s32.totalorder %s14, 1
    %p105 = por %p103, %p104
    %p106 = scmp.ne.s32.totalorder %s95, %s96
    %p107 = scmp.eq.s32.totalorder %s14, 0
    %p108 = por %p106, %p107
    %p109 = scmp.ne.s32.totalorder %s95, %s96
    %p110 = scmp.eq.s32.totalorder %s15, 1
    %p111 = por %p109, %p110
    %p113 = scmp.ne.s32.totalorder %s96, %s112
    %p114 = scmp.eq.s32.totalorder %s15, 0
    %p115 = por %p113, %p114
    %p116 = scmp.le.s32.totalorder 1, %s9
    %p117 = scmp.lt.s32.totalorder %s9, 3
    %p118 = pnand %p116, %p117
    %p119 = pneg %p118
    // Predicated region
    $region9: #{_lambda_.7} parent=5 // pred_check
      _
    $region10: #{_lambda_.7} parent=5 // pred_check_branch
      %121 = sbr.rel (%p118) target = $region12
    $region11: #{_lambda_.7} parent=5 // pred_region
      %s122 = ssub.s32 %s9, 1
      // Predicated region
      $region13: #{_lambda_.7} parent=11 // pred_check
        %p123 = pneg %p56
      $region14: #{_lambda_.7} parent=11 // pred_check_branch
        %125 = sbr.rel (%p123) target = $region16
      $region15: #{_lambda_.7} parent=11 // pred_region
        _
      $region16: #{_lambda_.7} parent=11 // pred_fallthru
        _
    $region12: #{_lambda_.7} parent=5 // pred_fallthru
      _
    %p126 = scmp.lt.s32.totalorder %s9, 2
    // Predicated region
    $region17: #{_lambda_.7} parent=5 // pred_check
      %p127 = pneg %p126
    $region18: #{_lambda_.7} parent=5 // pred_check_branch
      %129 = sbr.rel (%p127) target = $region20
    $region19: #{_lambda_.7} parent=5 // pred_region
      // Predicated region
      $region21: #{_lambda_.7} parent=19 // pred_check
        %p130 = pneg %p29
      $region22: #{_lambda_.7} parent=19 // pred_check_branch
        %132 = sbr.rel (%p130) target = $region24
      $region23: #{_lambda_.7} parent=19 // pred_region
        %s133 = smul.u32 8, %s9
        %p134 = scmp.lt.s32.totalorder %s133, 15
        %s135 = scalar_select %p134, %s133, 15
        %s136 = smul.addr %s135, 4
        %s137 = scalar_lea.vmem %s0, %s136
        %s138 = smul.u32 8, %s9
      $region24: #{_lambda_.7} parent=19 // pred_fallthru
        _
      // Predicated region
      $region25: #{_lambda_.7} parent=19 // pred_check
        %p139 = pneg %p76
      $region26: #{_lambda_.7} parent=19 // pred_check_branch
        %141 = sbr.rel (%p139) target = $region28
      $region27: #{_lambda_.7} parent=19 // pred_region
        %s142 = smul.u32 8, %s9
        %p143 = scmp.lt.s32.totalorder %s142, 15
        %s144 = scalar_select %p143, %s142, 15
        %s145 = smul.addr %s144, 8
        %s146 = scalar_lea.vmem %s2, %s145
        %s147 = smul.u32 8, %s9
      $region28: #{_lambda_.7} parent=19 // pred_fallthru
        _
    $region20: #{_lambda_.7} parent=5 // pred_fallthru
      _
    %p148 = scmp.le.s32.totalorder 1, %s9
    %p149 = scmp.lt.s32.totalorder %s9, 3
    %p150 = pnand %p148, %p149
    %p151 = pneg %p150
    // Predicated region
    $region29: #{_lambda_.7} parent=5 // pred_check
      _
    $region30: #{_lambda_.7} parent=5 // pred_check_branch
      %153 = sbr.rel (%p150) target = $region32
    $region31: #{_lambda_.7} parent=5 // pred_region
      %s154 = ssub.s32 %s9, 1
      %s155 = smul.u32 8, %s14
      %p156 = scmp.lt.s32.totalorder %s155, 15
      %s157 = scalar_select %p156, %s155, 15
      %s158 = smul.addr %s157, 4
      %s159 = scalar_lea.vmem %s0, %s158
      %p160 = pneg %p35
      %p161 = pneg %p32
      %p162 = pneg %p56
      %p163 = pneg %p53
      %s164 = smul.u32 8, %s14
      %p165 = scmp.lt.s32.totalorder %s164, 15
      %s166 = scalar_select %p165, %s164, 15
      %s167 = smul.addr %s166, 8
      %s168 = scalar_lea.vmem %s2, %s167
      %p169 = pneg %p82
      %p170 = pneg %p79
      %p171 = pneg %p108
      %p172 = pneg %p105
      %s173 = smul.u32 8, %s14
      %p174 = scmp.lt.s32.totalorder %s173, 15
      %s175 = scalar_select %p174, %s173, 15
      %s176 = smul.addr %s175, 8
      %s177 = scalar_lea.vmem %s3, %s176
      %s178 = smul.u32 8, %s14
      %p179 = scmp.lt.s32.totalorder %s178, 15
      %s180 = scalar_select %p179, %s178, 15
      %s181 = smul.addr %s180, 4
      %s182 = scalar_lea.vmem %s0, %s181
      %s183 = smul.u32 8, %s14
      %s184 = smul.u32 8, %s14
      %p185 = scmp.lt.s32.totalorder %s184, 15
      %s186 = scalar_select %p185, %s184, 15
      %s187 = smul.addr %s186, 8
      %s188 = scalar_lea.vmem %s2, %s187
      %s189 = smul.u32 8, %s14
      %s190 = smul.u32 8, %s14
      %p191 = scmp.lt.s32.totalorder %s190, 15
      %s192 = scalar_select %p191, %s190, 15
      %s193 = smul.addr %s192, 8
      %s194 = scalar_lea.vmem %s3, %s193
      %s195 = smul.u32 8, %s14
      %v197 = vld [vmem:[%s182] sm:$0xf]
      %v198 = vld [vmem:[%s182 + $0x4] sm:$0xf]
      %v199 = vld [vmem:[%s182 + $0x8] sm:$0xf]
      %v200 = vld [vmem:[%s182 + $0xc] sm:$0xf]
      %v201 = vld [vmem:[%s182 + $0x10] sm:$0xf]
      %v202 = vld [vmem:[%s182 + $0x14] sm:$0xf]
      %v203 = vld [vmem:[%s182 + $0x18] sm:$0xf]
      %v204 = vld [vmem:[%s182 + $0x1c] sm:$0xf]
      %v205 = vld [vmem:[%s1] sm:$0xf]
      %v206 = vld [vmem:[%s1 + $0x4] sm:$0xf]
      %v207 = vld [vmem:[%s1 + $0x8] sm:$0xf]
      %v208 = vld [vmem:[%s1 + $0xc] sm:$0xf]
      %v209 = vld [vmem:[%s1 + $0x10] sm:$0xf]
      %v210 = vld [vmem:[%s1 + $0x14] sm:$0xf]
      %v211 = vld [vmem:[%s1 + $0x18] sm:$0xf]
      %v212 = vld [vmem:[%s1 + $0x1c] sm:$0xf]
      %v213 = vld [vmem:[%s1 + $0x20] sm:$0xf]
      %v214 = vld [vmem:[%s188] sm:$0xff]
      %v215 = vld [vmem:[%s188 + $0x8] sm:$0xff]
      %v216 = vld [vmem:[%s188 + $0x10] sm:$0xff]
      %v217 = vld [vmem:[%s188 + $0x18] sm:$0xff]
      %v218 = vld [vmem:[%s188 + $0x20] sm:$0xff]
      %v219 = vld [vmem:[%s188 + $0x28] sm:$0xff]
      %v220 = vld [vmem:[%s188 + $0x30] sm:$0xff]
      %v221 = vld [vmem:[%s188 + $0x38] sm:$0xff]
      %v230 = vunpack.c.l.b16 %v197
      %v231 = vunpack.c.l.b16 %v198
      %v232 = vunpack.c.l.b16 %v199
      %v233 = vunpack.c.l.b16 %v200
      %v234 = vunpack.c.l.b16 %v201
      %v235 = vunpack.c.l.b16 %v202
      %v236 = vunpack.c.l.b16 %v203
      %v237 = vunpack.c.l.b16 %v204
      %v238 = vpack.c.b16 %v231, %v230
      %v239 = vpack.c.b16 %v233, %v232
      %v240 = vpack.c.b16 %v235, %v234
      %v241 = vpack.c.b16 %v237, %v236
      %v251 = vunpack.c.l.b16 %v205
      %v252 = vunpack.c.l.b16 %v206
      %v253 = vunpack.c.l.b16 %v207
      %v254 = vunpack.c.l.b16 %v208
      %v255 = vunpack.c.l.b16 %v209
      %v256 = vunpack.c.l.b16 %v210
      %v257 = vunpack.c.l.b16 %v211
      %v258 = vunpack.c.l.b16 %v212
      %v259 = vunpack.c.l.b16 %v213
      %v260 = vpack.c.b16 %v252, %v251
      %v261 = vpack.c.b16 %v254, %v253
      %v262 = vpack.c.b16 %v256, %v255
      %v263 = vpack.c.b16 %v258, %v257
      %v264 = vpack.c.b16 %v259, %v259
      %vm269 = vcmask 588800
      %v271 = vsel %vm269, %v238, 0
      %v274 = vsel %vm269, %v239, 0
      %v277 = vsel %vm269, %v240, 0
      %v280 = vsel %vm269, %v241, 0
      %vm282 = vcmask 1043456
      %v284 = vsel %vm282, %v264, 0
      %286 = vmatprep.subr.bf16.mxu0 0
      %287 = vmatpush1.bf16.msra.mxu0 %v260
      %288 = vmatprep.subr.bf16.mxu0 0
      %289 = vmatpush1.bf16.msra.mxu0 %v261
      %290 = vmatprep.subr.bf16.mxu0 0
      %291 = vmatpush1.bf16.msra.mxu0 %v262
      %292 = vmatprep.subr.bf16.mxu0 0
      %293 = vmatpush1.bf16.msra.mxu0 %v263
      %294 = vmatprep.subr.bf16.mxu0 0
      %295 = vmatpush1.bf16.msra.mxu0 %v284
      %296 = vmatprep.subr.bf16.mxu0 0
      %297 = vmatpush1.bf16.msra.mxu0 0
      %298 = vmatprep.subr.bf16.mxu0 0
      %299 = vmatpush1.bf16.msra.mxu0 0
      %300 = vmatprep.subr.bf16.mxu0 0
      %301 = vmatpush1.bf16.msra.mxu0 0
      %302 = vmatprep.subr.bf16.mxu0 0
      %303 = vmatpush1.bf16.msra.mxu0 0
      %304 = vmatprep.subr.bf16.mxu0 0
      %305 = vmatpush1.bf16.msra.mxu0 0
      %306 = vmatprep.subr.bf16.mxu0 0
      %307 = vmatpush1.bf16.msra.mxu0 0
      %308 = vmatprep.subr.bf16.mxu0 0
      %309 = vmatpush1.bf16.msra.mxu0 0
      %310 = vmatprep.subr.bf16.mxu0 0
      %311 = vmatpush1.bf16.msra.mxu0 0
      %312 = vmatprep.subr.bf16.mxu0 0
      %313 = vmatpush1.bf16.msra.mxu0 0
      %314 = vmatprep.subr.bf16.mxu0 0
      %315 = vmatpush1.bf16.msra.mxu0 0
      %316 = vmatprep.subr.bf16.mxu0 0
      %317 = vmatpush1.bf16.msra.mxu0 0
      %318 = vmatprep.mubr.bf16.mxu0 0
      %319 = vmatmul.mubr.bf16.gmra.mrb[0].mxu0 %v271
      %v320 = vpop.f32.mrb[0].mxu0
      %v321 = vadd.f32 %v214, %v320
      %v322 = vpop.f32.mrb[0].mxu0
      %v323 = vpop.f32.mrb[0].mxu0
      %v324 = vadd.f32 %v215, %v323
      %v325 = vpop.f32.mrb[0].mxu0
      %326 = vmatprep.mubr.bf16.mxu0 0
      %327 = vmatmul.mubr.bf16.gmra.mrb[0].mxu0 %v274
      %v328 = vpop.f32.mrb[0].mxu0
      %v329 = vadd.f32 %v216, %v328
      %v330 = vpop.f32.mrb[0].mxu0
      %v331 = vpop.f32.mrb[0].mxu0
      %v332 = vadd.f32 %v217, %v331
      %v333 = vpop.f32.mrb[0].mxu0
      %334 = vmatprep.mubr.bf16.mxu0 0
      %335 = vmatmul.mubr.bf16.gmra.mrb[0].mxu0 %v277
      %v336 = vpop.f32.mrb[0].mxu0
      %v337 = vadd.f32 %v218, %v336
      %v338 = vpop.f32.mrb[0].mxu0
      %v339 = vpop.f32.mrb[0].mxu0
      %v340 = vadd.f32 %v219, %v339
      %v341 = vpop.f32.mrb[0].mxu0
      %342 = vmatprep.mubr.bf16.mxu0 0
      %343 = vmatmul.mubr.bf16.gmra.mrb[0].mxu0 %v280
      %v344 = vpop.f32.mrb[0].mxu0
      %v345 = vadd.f32 %v220, %v344
      %v346 = vpop.f32.mrb[0].mxu0
      %v347 = vpop.f32.mrb[0].mxu0
      %v348 = vadd.f32 %v221, %v347
      %v349 = vpop.f32.mrb[0].mxu0
      %350 = vdwg.mxu0
      %vm351 = vcmask 64512
      %352 = vst.msk [vmem:[%s194] sm:$0xff] %vm351, %v321
      %353 = vst.msk [vmem:[%s194 + $0x8] sm:$0xff] %vm351, %v324
      %354 = vst.msk [vmem:[%s194 + $0x10] sm:$0xff] %vm351, %v329
      %355 = vst.msk [vmem:[%s194 + $0x18] sm:$0xff] %vm351, %v332
      %356 = vst.msk [vmem:[%s194 + $0x20] sm:$0xff] %vm351, %v337
      %357 = vst.msk [vmem:[%s194 + $0x28] sm:$0xff] %vm351, %v340
      %358 = vst.msk [vmem:[%s194 + $0x30] sm:$0xff] %vm351, %v345
      %359 = vst.msk [vmem:[%s194 + $0x38] sm:$0xff] %vm351, %v348
      %s360 = smul.u32 8, %s14
      %p361 = scmp.lt.s32.totalorder %s360, 15
      %s362 = scalar_select %p361, %s360, 15
      %s363 = smul.addr %s362, 8
      %s364 = scalar_lea.vmem %s3, %s363
      // Predicated region
      $region33: #{_lambda_.7} parent=31 // pred_check
        %p365 = pneg %p105
      $region34: #{_lambda_.7} parent=31 // pred_check_branch
        %367 = sbr.rel (%p365) target = $region36
      $region35: #{_lambda_.7} parent=31 // pred_region
        %s368 = smul.u32 8, %s14
      $region36: #{_lambda_.7} parent=31 // pred_fallthru
        _
    $region32: #{_lambda_.7} parent=5 // pred_fallthru
      _
    %p369 = scmp.le.s32.totalorder 2, %s9
    // Predicated region
    $region37: #{_lambda_.7} parent=5 // pred_check
      %p370 = pneg %p369
    $region38: #{_lambda_.7} parent=5 // pred_check_branch
      %372 = sbr.rel (%p370) target = $region40
    $region39: #{_lambda_.7} parent=5 // pred_region
      %s373 = ssub.s32 %s9, 2
      // Predicated region
      $region41: #{_lambda_.7} parent=39 // pred_check
        %p374 = pneg %p111
      $region42: #{_lambda_.7} parent=39 // pred_check_branch
        %376 = sbr.rel (%p374) target = $region44
      $region43: #{_lambda_.7} parent=39 // pred_region
        %s377 = smul.u32 8, %s15
        %p378 = scmp.lt.s32.totalorder %s377, 15
        %s379 = scalar_select %p378, %s377, 15
        %s380 = smul.addr %s379, 8
        %s381 = scalar_lea.vmem %s3, %s380
      $region44: #{_lambda_.7} parent=39 // pred_fallthru
        _
    $region40: #{_lambda_.7} parent=5 // pred_fallthru
      _
  $region6: #{_lambda_.7} parent=0 // loop_footer
    %s13 = sadd.s32 1, %s9
  $region7: #{_lambda_.7} parent=0 // loop_footer_branch
    %8 = sbr.rel target = $region3
  $region8: #{_lambda_.7} parent=0 // loop_exit
    _

// kernel: _lambda_.8
$region0: #{_lambda_.8}
  #allocation0 [shape = 'u32[]', space=smem, size = 0x4, offset = 0x4, fixed_abs, tag = 'smem constant byte address 0x4 - core index']
  #allocation1 [shape = 'u32[144,128]{1,0:T(1,128)}', space=vmem, size = 0x12000, scoped, tag = 'internal scratch']
  %s0 = inlined_call_operand.vmem [shape: bf16[128,72], index: 0, kind: input, shape index: {}]
  %s1 = inlined_call_operand.vmem [shape: bf16[72,8], index: 1, kind: input, shape index: {}]
  %s2 = inlined_call_operand.vmem [shape: f32[1,8], index: 2, kind: input, shape index: {}]
  %s3 = inlined_call_operand.vmem [shape: f32[1,8], index: 3, kind: input, shape index: {}]
  %s4 = inlined_call_operand.vmem [shape: bf16[128,8], index: 4, kind: output, shape index: {}]
  %s5 = sld [smem:[#allocation0]]
  $region49: #{_lambda_.8} parent=0
    _
  %s7 = ssub.s32 1, %s5
  %s8 = scalar_select 0, %s7, %s5
  loop: start=0, step=1, limit=4
  $region2: #{_lambda_.8} parent=0 // loop_pre_header
    _
  $region3: #{_lambda_.8} parent=0 // loop_header
    %s10 = sphi 0, %s14
    %p11 = scmp.ge.s32.totalorder %s10, 4
    %s20 = sphi 0, %s22
    %s23 = sphi 0, %s20
    %s24 = sphi 0, %s23
    %s40 = sphi 0, %s24
    %s44 = sphi 0, %s44
    %s46 = sphi 0, %s44
    %s47 = sphi 0, %s46
    %s61 = sphi 0, %s47
    %s65 = sphi 0, %s65
    %s67 = sphi 0, %s65
    %s68 = sphi 0, %s67
    %s82 = sphi 0, %s68
    %s86 = sphi 0, %s86
    %s88 = sphi 0, %s86
    %s89 = sphi 0, %s88
    %s103 = sphi 0, %s89
    %s109 = sphi 0, %s111
    %s112 = sphi 0, %s109
    %s113 = sphi 0, %s112
    %s129 = sphi 0, %s113
  $region4: #{_lambda_.8} parent=0 // loop_header_branch
    %13 = sbr.rel (%p11) target = $region8
  $region5: #{_lambda_.8} parent=0 // loop_body
    %s15 = ssub.s32 %s10, 1
    %s16 = ssub.s32 %s10, 2
    %s17 = sadd.s32 %s10, 1
    %s18 = ssub.s32 %s10, %s17
    %p19 = scmp.eq.s32.totalorder %s18, 0
    %s21 = sadd.s32 %s20, 1
    %s22 = scalar_select %p19, %s20, %s21
    %p25 = pneg %p19
    %p26 = scmp.eq.s32.totalorder %s10, 1
    %p27 = por %p25, %p26
    %p28 = scmp.ne.s32.totalorder %s20, %s23
    %p29 = scmp.eq.s32.totalorder %s10, 0
    %p30 = por %p28, %p29
    %p31 = scmp.ne.s32.totalorder %s20, %s23
    %p32 = scmp.eq.s32.totalorder %s15, 1
    %p33 = por %p31, %p32
    %p34 = scmp.ne.s32.totalorder %s23, %s24
    %p35 = scmp.eq.s32.totalorder %s15, 0
    %p36 = por %p34, %p35
    %p37 = scmp.ne.s32.totalorder %s23, %s24
    %p38 = scmp.eq.s32.totalorder %s16, 1
    %p39 = por %p37, %p38
    %p41 = scmp.ne.s32.totalorder %s24, %s40
    %p42 = scmp.eq.s32.totalorder %s16, 0
    %p43 = por %p41, %p42
    %s45 = sadd.s32 %s44, 1
    %p48 = scmp.eq.s32.totalorder %s10, 1
    %p49 = scmp.ne.s32.totalorder %s44, %s46
    %p50 = scmp.eq.s32.totalorder %s10, 0
    %p51 = por %p49, %p50
    %p52 = scmp.ne.s32.totalorder %s44, %s46
    %p53 = scmp.eq.s32.totalorder %s15, 1
    %p54 = por %p52, %p53
    %p55 = scmp.ne.s32.totalorder %s46, %s47
    %p56 = scmp.eq.s32.totalorder %s15, 0
    %p57 = por %p55, %p56
    %p58 = scmp.ne.s32.totalorder %s46, %s47
    %p59 = scmp.eq.s32.totalorder %s16, 1
    %p60 = por %p58, %p59
    %p62 = scmp.ne.s32.totalorder %s47, %s61
    %p63 = scmp.eq.s32.totalorder %s16, 0
    %p64 = por %p62, %p63
    %s66 = sadd.s32 %s65, 1
    %p69 = scmp.eq.s32.totalorder %s10, 1
    %p70 = scmp.ne.s32.totalorder %s65, %s67
    %p71 = scmp.eq.s32.totalorder %s10, 0
    %p72 = por %p70, %p71
    %p73 = scmp.ne.s32.totalorder %s65, %s67
    %p74 = scmp.eq.s32.totalorder %s15, 1
    %p75 = por %p73, %p74
    %p76 = scmp.ne.s32.totalorder %s67, %s68
    %p77 = scmp.eq.s32.totalorder %s15, 0
    %p78 = por %p76, %p77
    %p79 = scmp.ne.s32.totalorder %s67, %s68
    %p80 = scmp.eq.s32.totalorder %s16, 1
    %p81 = por %p79, %p80
    %p83 = scmp.ne.s32.totalorder %s68, %s82
    %p84 = scmp.eq.s32.totalorder %s16, 0
    %p85 = por %p83, %p84
    %s87 = sadd.s32 %s86, 1
    %p90 = scmp.eq.s32.totalorder %s10, 1
    %p91 = scmp.ne.s32.totalorder %s86, %s88
    %p92 = scmp.eq.s32.totalorder %s10, 0
    %p93 = por %p91, %p92
    %p94 = scmp.ne.s32.totalorder %s86, %s88
    %p95 = scmp.eq.s32.totalorder %s15, 1
    %p96 = por %p94, %p95
    %p97 = scmp.ne.s32.totalorder %s88, %s89
    %p98 = scmp.eq.s32.totalorder %s15, 0
    %p99 = por %p97, %p98
    %p100 = scmp.ne.s32.totalorder %s88, %s89
    %p101 = scmp.eq.s32.totalorder %s16, 1
    %p102 = por %p100, %p101
    %p104 = scmp.ne.s32.totalorder %s89, %s103
    %p105 = scmp.eq.s32.totalorder %s16, 0
    %p106 = por %p104, %p105
    %s107 = ssub.s32 %s10, %s17
    %p108 = scmp.eq.s32.totalorder %s107, 0
    %s110 = sadd.s32 %s109, 1
    %s111 = scalar_select %p108, %s109, %s110
    %p114 = pneg %p108
    %p115 = scmp.eq.s32.totalorder %s10, 1
    %p116 = por %p114, %p115
    %p117 = scmp.ne.s32.totalorder %s109, %s112
    %p118 = scmp.eq.s32.totalorder %s10, 0
    %p119 = por %p117, %p118
    %p120 = scmp.ne.s32.totalorder %s109, %s112
    %p121 = scmp.eq.s32.totalorder %s15, 1
    %p122 = por %p120, %p121
    %p123 = scmp.ne.s32.totalorder %s112, %s113
    %p124 = scmp.eq.s32.totalorder %s15, 0
    %p125 = por %p123, %p124
    %p126 = scmp.ne.s32.totalorder %s112, %s113
    %p127 = scmp.eq.s32.totalorder %s16, 1
    %p128 = por %p126, %p127
    %p130 = scmp.ne.s32.totalorder %s113, %s129
    %p131 = scmp.eq.s32.totalorder %s16, 0
    %p132 = por %p130, %p131
    %p133 = scmp.le.s32.totalorder 1, %s10
    %p134 = scmp.lt.s32.totalorder %s10, 3
    %p135 = pnand %p133, %p134
    %p136 = pneg %p135
    // Predicated region
    $region9: #{_lambda_.8} parent=5 // pred_check
      _
    $region10: #{_lambda_.8} parent=5 // pred_check_branch
      %138 = sbr.rel (%p135) target = $region12
    $region11: #{_lambda_.8} parent=5 // pred_region
      %s139 = ssub.s32 %s10, 1
      // Predicated region
      $region13: #{_lambda_.8} parent=11 // pred_check
        %p140 = pneg %p57
      $region14: #{_lambda_.8} parent=11 // pred_check_branch
        %142 = sbr.rel (%p140) target = $region16
      $region15: #{_lambda_.8} parent=11 // pred_region
        _
      $region16: #{_lambda_.8} parent=11 // pred_fallthru
        _
      // Predicated region
      $region17: #{_lambda_.8} parent=11 // pred_check
        %p143 = pneg %p78
      $region18: #{_lambda_.8} parent=11 // pred_check_branch
        %145 = sbr.rel (%p143) target = $region20
      $region19: #{_lambda_.8} parent=11 // pred_region
        _
      $region20: #{_lambda_.8} parent=11 // pred_fallthru
        _
      // Predicated region
      $region21: #{_lambda_.8} parent=11 // pred_check
        %p146 = pneg %p99
      $region22: #{_lambda_.8} parent=11 // pred_check_branch
        %148 = sbr.rel (%p146) target = $region24
      $region23: #{_lambda_.8} parent=11 // pred_region
        _
      $region24: #{_lambda_.8} parent=11 // pred_fallthru
        _
    $region12: #{_lambda_.8} parent=5 // pred_fallthru
      _
    %p149 = scmp.lt.s32.totalorder %s10, 2
    // Predicated region
    $region25: #{_lambda_.8} parent=5 // pred_check
      %p150 = pneg %p149
    $region26: #{_lambda_.8} parent=5 // pred_check_branch
      %152 = sbr.rel (%p150) target = $region28
    $region27: #{_lambda_.8} parent=5 // pred_region
      // Predicated region
      $region29: #{_lambda_.8} parent=27 // pred_check
        %p153 = pneg %p30
      $region30: #{_lambda_.8} parent=27 // pred_check_branch
        %155 = sbr.rel (%p153) target = $region32
      $region31: #{_lambda_.8} parent=27 // pred_region
        %s156 = smul.u32 8, %s10
        %p157 = scmp.lt.s32.totalorder %s156, 15
        %s158 = scalar_select %p157, %s156, 15
        %s159 = smul.addr %s158, 4
        %s160 = scalar_lea.vmem %s0, %s159
        %s161 = smul.u32 8, %s10
      $region32: #{_lambda_.8} parent=27 // pred_fallthru
        _
    $region28: #{_lambda_.8} parent=5 // pred_fallthru
      _
    %p162 = scmp.le.s32.totalorder 1, %s10
    %p163 = scmp.lt.s32.totalorder %s10, 3
    %p164 = pnand %p162, %p163
    %p165 = pneg %p164
    // Predicated region
    $region33: #{_lambda_.8} parent=5 // pred_check
      _
    $region34: #{_lambda_.8} parent=5 // pred_check_branch
      %167 = sbr.rel (%p164) target = $region36
    $region35: #{_lambda_.8} parent=5 // pred_region
      %s168 = ssub.s32 %s10, 1
      %s169 = smul.u32 8, %s15
      %p170 = scmp.lt.s32.totalorder %s169, 15
      %s171 = scalar_select %p170, %s169, 15
      %s172 = smul.addr %s171, 4
      %s173 = scalar_lea.vmem %s0, %s172
      %p174 = pneg %p36
      %p175 = pneg %p33
      %p176 = pneg %p57
      %p177 = pneg %p54
      %p178 = pneg %p78
      %p179 = pneg %p75
      %p180 = pneg %p99
      %p181 = pneg %p96
      %p182 = pneg %p125
      %p183 = pneg %p122
      %s184 = smul.u32 8, %s15
      %p185 = scmp.lt.s32.totalorder %s184, 15
      %s186 = scalar_select %p185, %s184, 15
      %s187 = smul.addr %s186, 4
      %s188 = scalar_lea.vmem %s4, %s187
      %s189 = smul.u32 8, %s15
      %p190 = scmp.lt.s32.totalorder %s189, 15
      %s191 = scalar_select %p190, %s189, 15
      %s192 = smul.addr %s191, 4
      %s193 = scalar_lea.vmem %s0, %s192
      %s194 = smul.u32 8, %s15
      %s195 = smul.u32 8, %s15
      %p196 = scmp.lt.s32.totalorder %s195, 15
      %s197 = scalar_select %p196, %s195, 15
      %s198 = smul.addr %s197, 4
      %s199 = scalar_lea.vmem %s4, %s198
      %s200 = smul.u32 8, %s15
      %v202 = vld [vmem:[%s193] sm:$0xf]
      %v203 = vld [vmem:[%s193 + $0x4] sm:$0xf]
      %v204 = vld [vmem:[%s193 + $0x8] sm:$0xf]
      %v205 = vld [vmem:[%s193 + $0xc] sm:$0xf]
      %v206 = vld [vmem:[%s193 + $0x10] sm:$0xf]
      %v207 = vld [vmem:[%s193 + $0x14] sm:$0xf]
      %v208 = vld [vmem:[%s193 + $0x18] sm:$0xf]
      %v209 = vld [vmem:[%s193 + $0x1c] sm:$0xf]
      %v210 = vld [vmem:[%s1] sm:$0xf]
      %v211 = vld [vmem:[%s1 + $0x4] sm:$0xf]
      %v212 = vld [vmem:[%s1 + $0x8] sm:$0xf]
      %v213 = vld [vmem:[%s1 + $0xc] sm:$0xf]
      %v214 = vld [vmem:[%s1 + $0x10] sm:$0xf]
      %v215 = vld [vmem:[%s1 + $0x14] sm:$0xf]
      %v216 = vld [vmem:[%s1 + $0x18] sm:$0xf]
      %v217 = vld [vmem:[%s1 + $0x1c] sm:$0xf]
      %v218 = vld [vmem:[%s1 + $0x20] sm:$0xf]
      %v227 = vunpack.c.l.b16 %v202
      %v228 = vunpack.c.l.b16 %v203
      %v229 = vunpack.c.l.b16 %v204
      %v230 = vunpack.c.l.b16 %v205
      %v231 = vunpack.c.l.b16 %v206
      %v232 = vunpack.c.l.b16 %v207
      %v233 = vunpack.c.l.b16 %v208
      %v234 = vunpack.c.l.b16 %v209
      %v235 = vpack.c.b16 %v228, %v227
      %v236 = vpack.c.b16 %v230, %v229
      %v237 = vpack.c.b16 %v232, %v231
      %v238 = vpack.c.b16 %v234, %v233
      %v248 = vunpack.c.l.b16 %v210
      %v249 = vunpack.c.l.b16 %v211
      %v250 = vunpack.c.l.b16 %v212
      %v251 = vunpack.c.l.b16 %v213
      %v252 = vunpack.c.l.b16 %v214
      %v253 = vunpack.c.l.b16 %v215
      %v254 = vunpack.c.l.b16 %v216
      %v255 = vunpack.c.l.b16 %v217
      %v256 = vunpack.c.l.b16 %v218
      %v257 = vpack.c.b16 %v249, %v248
      %v258 = vpack.c.b16 %v251, %v250
      %v259 = vpack.c.b16 %v253, %v252
      %v260 = vpack.c.b16 %v255, %v254
      %v261 = vpack.c.b16 %v256, %v256
      %vm266 = vcmask 588800
      %v268 = vsel %vm266, %v235, 0
      %v271 = vsel %vm266, %v236, 0
      %v274 = vsel %vm266, %v237, 0
      %v277 = vsel %vm266, %v238, 0
      %vm279 = vcmask 1043456
      %v281 = vsel %vm279, %v261, 0
      %283 = vmatprep.subr.bf16.mxu0 0
      %284 = vmatpush1.bf16.msra.mxu0 %v257
      %285 = vmatprep.subr.bf16.mxu0 0
      %286 = vmatpush1.bf16.msra.mxu0 %v258
      %287 = vmatprep.subr.bf16.mxu0 0
      %288 = vmatpush1.bf16.msra.mxu0 %v259
      %289 = vmatprep.subr.bf16.mxu0 0
      %290 = vmatpush1.bf16.msra.mxu0 %v260
      %291 = vmatprep.subr.bf16.mxu0 0
      %292 = vmatpush1.bf16.msra.mxu0 %v281
      %293 = vmatprep.subr.bf16.mxu0 0
      %294 = vmatpush1.bf16.msra.mxu0 0
      %295 = vmatprep.subr.bf16.mxu0 0
      %296 = vmatpush1.bf16.msra.mxu0 0
      %297 = vmatprep.subr.bf16.mxu0 0
      %298 = vmatpush1.bf16.msra.mxu0 0
      %299 = vmatprep.subr.bf16.mxu0 0
      %300 = vmatpush1.bf16.msra.mxu0 0
      %301 = vmatprep.subr.bf16.mxu0 0
      %302 = vmatpush1.bf16.msra.mxu0 0
      %303 = vmatprep.subr.bf16.mxu0 0
      %304 = vmatpush1.bf16.msra.mxu0 0
      %305 = vmatprep.subr.bf16.mxu0 0
      %306 = vmatpush1.bf16.msra.mxu0 0
      %307 = vmatprep.subr.bf16.mxu0 0
      %308 = vmatpush1.bf16.msra.mxu0 0
      %309 = vmatprep.subr.bf16.mxu0 0
      %310 = vmatpush1.bf16.msra.mxu0 0
      %311 = vmatprep.subr.bf16.mxu0 0
      %312 = vmatpush1.bf16.msra.mxu0 0
      %313 = vmatprep.subr.bf16.mxu0 0
      %314 = vmatpush1.bf16.msra.mxu0 0
      %315 = vmatprep.mubr.bf16.mxu0 0
      %316 = vmatmul.mubr.bf16.gmra.mrb[0].mxu0 %v268
      %v317 = vpop.f32.mrb[0].mxu0
      %v318 = vadd.f32 0.0, %v317
      %v319 = vpop.f32.mrb[0].mxu0
      %v320 = vpop.f32.mrb[0].mxu0
      %v321 = vadd.f32 0.0, %v320
      %v322 = vpop.f32.mrb[0].mxu0
      %323 = vmatprep.mubr.bf16.mxu0 0
      %324 = vmatmul.mubr.bf16.gmra.mrb[0].mxu0 %v271
      %v325 = vpop.f32.mrb[0].mxu0
      %v326 = vadd.f32 0.0, %v325
      %v327 = vpop.f32.mrb[0].mxu0
      %v328 = vpop.f32.mrb[0].mxu0
      %v329 = vadd.f32 0.0, %v328
      %v330 = vpop.f32.mrb[0].mxu0
      %331 = vmatprep.mubr.bf16.mxu0 0
      %332 = vmatmul.mubr.bf16.gmra.mrb[0].mxu0 %v274
      %v333 = vpop.f32.mrb[0].mxu0
      %v334 = vadd.f32 0.0, %v333
      %v335 = vpop.f32.mrb[0].mxu0
      %v336 = vpop.f32.mrb[0].mxu0
      %v337 = vadd.f32 0.0, %v336
      %v338 = vpop.f32.mrb[0].mxu0
      %339 = vmatprep.mubr.bf16.mxu0 0
      %340 = vmatmul.mubr.bf16.gmra.mrb[0].mxu0 %v277
      %v341 = vpop.f32.mrb[0].mxu0
      %v342 = vadd.f32 0.0, %v341
      %v343 = vpop.f32.mrb[0].mxu0
      %v344 = vpop.f32.mrb[0].mxu0
      %v345 = vadd.f32 0.0, %v344
      %v346 = vpop.f32.mrb[0].mxu0
      %347 = vdwg.mxu0
      %v348 = vld [vmem:[%s2] sm:$0x1]
      %v350 = vlaneseq
      %v351 = vshrl.u32 %v350, 7
      %v352 = vsub.s32 0, %v351
      %v353 = vrot.slane %v348, %v352
      %v355 = vmul.f32 %v318, %v353
      %v356 = vmul.f32 %v321, %v353
      %v357 = vmul.f32 %v326, %v353
      %v358 = vmul.f32 %v329, %v353
      %v359 = vmul.f32 %v334, %v353
      %v360 = vmul.f32 %v337, %v353
      %v361 = vmul.f32 %v342, %v353
      %v362 = vmul.f32 %v345, %v353
      %v363 = vld [vmem:[%s3] sm:$0x1]
      %v365 = vlaneseq
      %v366 = vshrl.u32 %v365, 7
      %v367 = vsub.s32 0, %v366
      %v368 = vrot.slane %v363, %v367
      %v370 = vadd.f32 %v355, %v368
      %v371 = vadd.f32 %v356, %v368
      %v372 = vadd.f32 %v357, %v368
      %v373 = vadd.f32 %v358, %v368
      %v374 = vadd.f32 %v359, %v368
      %v375 = vadd.f32 %v360, %v368
      %v376 = vadd.f32 %v361, %v368
      %v377 = vadd.f32 %v362, %v368
      %vm378 = vcmp.gt.f32.partialorder %v370, 0.0
      %vm379 = vcmp.gt.f32.partialorder %v371, 0.0
      %vm380 = vcmp.gt.f32.partialorder %v372, 0.0
      %vm381 = vcmp.gt.f32.partialorder %v373, 0.0
      %vm382 = vcmp.gt.f32.partialorder %v374, 0.0
      %vm383 = vcmp.gt.f32.partialorder %v375, 0.0
      %vm384 = vcmp.gt.f32.partialorder %v376, 0.0
      %vm385 = vcmp.gt.f32.partialorder %v377, 0.0
      %v386 = vmul.f32 %v370, 0.1
      %v387 = vmul.f32 %v371, 0.1
      %v388 = vmul.f32 %v372, 0.1
      %v389 = vmul.f32 %v373, 0.1
      %v390 = vmul.f32 %v374, 0.1
      %v391 = vmul.f32 %v375, 0.1
      %v392 = vmul.f32 %v376, 0.1
      %v393 = vmul.f32 %v377, 0.1
      %v394 = vsel %vm378, %v370, %v386
      %v395 = vsel %vm379, %v371, %v387
      %v396 = vsel %vm380, %v372, %v388
      %v397 = vsel %vm381, %v373, %v389
      %v398 = vsel %vm382, %v374, %v390
      %v399 = vsel %vm383, %v375, %v391
      %v400 = vsel %vm384, %v376, %v392
      %v401 = vsel %vm385, %v377, %v393
      %v402 = vpack.c.bf16 %v395, %v394
      %v403 = vpack.c.bf16 %v397, %v396
      %v404 = vpack.c.bf16 %v399, %v398
      %v405 = vpack.c.bf16 %v401, %v400
      %v410 = vunpack.c.l.b16 %v402
      %v411 = vunpack.c.h.b16 %v402
      %v412 = vunpack.c.l.b16 %v403
      %v413 = vunpack.c.h.b16 %v403
      %v414 = vunpack.c.l.b16 %v404
      %v415 = vunpack.c.h.b16 %v404
      %v416 = vunpack.c.l.b16 %v405
      %v417 = vunpack.c.h.b16 %v405
      %v418 = vpack.c.b16 %v410, %v410
      %v419 = vpack.c.b16 %v411, %v411
      %v420 = vpack.c.b16 %v412, %v412
      %v421 = vpack.c.b16 %v413, %v413
      %v422 = vpack.c.b16 %v414, %v414
      %v423 = vpack.c.b16 %v415, %v415
      %v424 = vpack.c.b16 %v416, %v416
      %v425 = vpack.c.b16 %v417, %v417
      %vm434 = vcmask 60416
      %435 = vst.msk [vmem:[%s199] sm:$0xf] %vm434, %v418
      %436 = vst.msk [vmem:[%s199 + $0x4] sm:$0xf] %vm434, %v419
      %437 = vst.msk [vmem:[%s199 + $0x8] sm:$0xf] %vm434, %v420
      %438 = vst.msk [vmem:[%s199 + $0xc] sm:$0xf] %vm434, %v421
      %439 = vst.msk [vmem:[%s199 + $0x10] sm:$0xf] %vm434, %v422
      %440 = vst.msk [vmem:[%s199 + $0x14] sm:$0xf] %vm434, %v423
      %441 = vst.msk [vmem:[%s199 + $0x18] sm:$0xf] %vm434, %v424
      %442 = vst.msk [vmem:[%s199 + $0x1c] sm:$0xf] %vm434, %v425
      %s443 = smul.u32 8, %s15
      %p444 = scmp.lt.s32.totalorder %s443, 15
      %s445 = scalar_select %p444, %s443, 15
      %s446 = smul.addr %s445, 4
      %s447 = scalar_lea.vmem %s4, %s446
      // Predicated region
      $region37: #{_lambda_.8} parent=35 // pred_check
        %p448 = pneg %p122
      $region38: #{_lambda_.8} parent=35 // pred_check_branch
        %450 = sbr.rel (%p448) target = $region40
      $region39: #{_lambda_.8} parent=35 // pred_region
        %s451 = smul.u32 8, %s15
      $region40: #{_lambda_.8} parent=35 // pred_fallthru
        _
    $region36: #{_lambda_.8} parent=5 // pred_fallthru
      _
    %p452 = scmp.le.s32.totalorder 2, %s10
    // Predicated region
    $region41: #{_lambda_.8} parent=5 // pred_check
      %p453 = pneg %p452
    $region42: #{_lambda_.8} parent=5 // pred_check_branch
      %455 = sbr.rel (%p453) target = $region44
    $region43: #{_lambda_.8} parent=5 // pred_region
      %s456 = ssub.s32 %s10, 2
      // Predicated region
      $region45: #{_lambda_.8} parent=43 // pred_check
        %p457 = pneg %p128
      $region46: #{_lambda_.8} parent=43 // pred_check_branch
        %459 = sbr.rel (%p457) target = $region48
      $region47: #{_lambda_.8} parent=43 // pred_region
        %s460 = smul.u32 8, %s16
        %p461 = scmp.lt.s32.totalorder %s460, 15
        %s462 = scalar_select %p461, %s460, 15
        %s463 = smul.addr %s462, 4
        %s464 = scalar_lea.vmem %s4, %s463
      $region48: #{_lambda_.8} parent=43 // pred_fallthru
        _
    $region44: #{_lambda_.8} parent=5 // pred_fallthru
      _
  $region6: #{_lambda_.8} parent=0 // loop_footer
    %s14 = sadd.s32 1, %s10
  $region7: #{_lambda_.8} parent=0 // loop_footer_branch
    %9 = sbr.rel target = $region3
  $region8: #{_lambda_.8} parent=0 // loop_exit
    _

// kernel: _lambda_.9
$region0: #{_lambda_.9}
  #allocation0 [shape = 'u32[]', space=smem, size = 0x4, offset = 0x4, fixed_abs, tag = 'smem constant byte address 0x4 - core index']
  #allocation1 [shape = 'u32[144,128]{1,0:T(1,128)}', space=vmem, size = 0x12000, scoped, tag = 'internal scratch']
  %s0 = inlined_call_operand.vmem [shape: bf16[128,72], index: 0, kind: input, shape index: {}]
  %s1 = inlined_call_operand.vmem [shape: bf16[72,8], index: 1, kind: input, shape index: {}]
  %s2 = inlined_call_operand.vmem [shape: f32[128,8], index: 2, kind: input, shape index: {}]
  %s3 = inlined_call_operand.hbm [shape: f32[128,8], index: 3, kind: output, shape index: {}]
  %s4 = sld [smem:[#allocation0]]
  $region45: #{_lambda_.9} parent=0
    _
  %s6 = ssub.s32 1, %s4
  %s7 = scalar_select 0, %s6, %s4
  $region1: #{_lambda_.9} parent=0
    #allocation2 [shape = 'u8[65536]{0}', space=vmem, size = 0x10000, scoped, tag = 'output window, operand 0']
    #allocation3 [shape = 's32[2]{0}', space=sflag, size = 0x8, scoped, tag = 'scoped memory for _lambda_.9']
    %8 = vsyncpa [#allocation3], 0
    %s9 = scalar_lea.sflag [#allocation3], 1
    %10 = vsyncpa %s9, 0
    loop: start=0, step=1, limit=4
    $region2: #{_lambda_.9} parent=1 // loop_pre_header
      _
    $region3: #{_lambda_.9} parent=1 // loop_header
      %s12 = sphi 0, %s16
      %p13 = scmp.ge.s32.totalorder %s12, 4
      %s22 = sphi 0, %s24
      %s25 = sphi 0, %s22
      %s26 = sphi 0, %s25
      %s42 = sphi 0, %s26
      %s46 = sphi 0, %s46
      %s48 = sphi 0, %s46
      %s49 = sphi 0, %s48
      %s63 = sphi 0, %s49
      %s69 = sphi 0, %s71
      %s72 = sphi 0, %s69
      %s73 = sphi 0, %s72
      %s89 = sphi 0, %s73
      %s95 = sphi 0, %s97
      %s98 = sphi 0, %s95
      %s99 = sphi 0, %s98
      %s115 = sphi 0, %s99
    $region4: #{_lambda_.9} parent=1 // loop_header_branch
      %15 = sbr.rel (%p13) target = $region8
    $region5: #{_lambda_.9} parent=1 // loop_body
      %s17 = ssub.s32 %s12, 1
      %s18 = ssub.s32 %s12, 2
      %s19 = sadd.s32 %s12, 1
      %s20 = ssub.s32 %s12, %s19
      %p21 = scmp.eq.s32.totalorder %s20, 0
      %s23 = sadd.s32 %s22, 1
      %s24 = scalar_select %p21, %s22, %s23
      %p27 = pneg %p21
      %p28 = scmp.eq.s32.totalorder %s12, 1
      %p29 = por %p27, %p28
      %p30 = scmp.ne.s32.totalorder %s22, %s25
      %p31 = scmp.eq.s32.totalorder %s12, 0
      %p32 = por %p30, %p31
      %p33 = scmp.ne.s32.totalorder %s22, %s25
      %p34 = scmp.eq.s32.totalorder %s17, 1
      %p35 = por %p33, %p34
      %p36 = scmp.ne.s32.totalorder %s25, %s26
      %p37 = scmp.eq.s32.totalorder %s17, 0
      %p38 = por %p36, %p37
      %p39 = scmp.ne.s32.totalorder %s25, %s26
      %p40 = scmp.eq.s32.totalorder %s18, 1
      %p41 = por %p39, %p40
      %p43 = scmp.ne.s32.totalorder %s26, %s42
      %p44 = scmp.eq.s32.totalorder %s18, 0
      %p45 = por %p43, %p44
      %s47 = sadd.s32 %s46, 1
      %p50 = scmp.eq.s32.totalorder %s12, 1
      %p51 = scmp.ne.s32.totalorder %s46, %s48
      %p52 = scmp.eq.s32.totalorder %s12, 0
      %p53 = por %p51, %p52
      %p54 = scmp.ne.s32.totalorder %s46, %s48
      %p55 = scmp.eq.s32.totalorder %s17, 1
      %p56 = por %p54, %p55
      %p57 = scmp.ne.s32.totalorder %s48, %s49
      %p58 = scmp.eq.s32.totalorder %s17, 0
      %p59 = por %p57, %p58
      %p60 = scmp.ne.s32.totalorder %s48, %s49
      %p61 = scmp.eq.s32.totalorder %s18, 1
      %p62 = por %p60, %p61
      %p64 = scmp.ne.s32.totalorder %s49, %s63
      %p65 = scmp.eq.s32.totalorder %s18, 0
      %p66 = por %p64, %p65
      %s67 = ssub.s32 %s12, %s19
      %p68 = scmp.eq.s32.totalorder %s67, 0
      %s70 = sadd.s32 %s69, 1
      %s71 = scalar_select %p68, %s69, %s70
      %p74 = pneg %p68
      %p75 = scmp.eq.s32.totalorder %s12, 1
      %p76 = por %p74, %p75
      %p77 = scmp.ne.s32.totalorder %s69, %s72
      %p78 = scmp.eq.s32.totalorder %s12, 0
      %p79 = por %p77, %p78
      %p80 = scmp.ne.s32.totalorder %s69, %s72
      %p81 = scmp.eq.s32.totalorder %s17, 1
      %p82 = por %p80, %p81
      %p83 = scmp.ne.s32.totalorder %s72, %s73
      %p84 = scmp.eq.s32.totalorder %s17, 0
      %p85 = por %p83, %p84
      %p86 = scmp.ne.s32.totalorder %s72, %s73
      %p87 = scmp.eq.s32.totalorder %s18, 1
      %p88 = por %p86, %p87
      %p90 = scmp.ne.s32.totalorder %s73, %s89
      %p91 = scmp.eq.s32.totalorder %s18, 0
      %p92 = por %p90, %p91
      %s93 = ssub.s32 %s12, %s19
      %p94 = scmp.eq.s32.totalorder %s93, 0
      %s96 = sadd.s32 %s95, 1
      %s97 = scalar_select %p94, %s95, %s96
      %p100 = pneg %p94
      %p101 = scmp.eq.s32.totalorder %s12, 1
      %p102 = por %p100, %p101
      %p103 = scmp.ne.s32.totalorder %s95, %s98
      %p104 = scmp.eq.s32.totalorder %s12, 0
      %p105 = por %p103, %p104
      %p106 = scmp.ne.s32.totalorder %s95, %s98
      %p107 = scmp.eq.s32.totalorder %s17, 1
      %p108 = por %p106, %p107
      %p109 = scmp.ne.s32.totalorder %s98, %s99
      %p110 = scmp.eq.s32.totalorder %s17, 0
      %p111 = por %p109, %p110
      %p112 = scmp.ne.s32.totalorder %s98, %s99
      %p113 = scmp.eq.s32.totalorder %s18, 1
      %p114 = por %p112, %p113
      %p116 = scmp.ne.s32.totalorder %s99, %s115
      %p117 = scmp.eq.s32.totalorder %s18, 0
      %p118 = por %p116, %p117
      %p119 = scmp.le.s32.totalorder 1, %s12
      %p120 = scmp.lt.s32.totalorder %s12, 3
      %p121 = pnand %p119, %p120
      %p122 = pneg %p121
      // Predicated region
      $region9: #{_lambda_.9} parent=5 // pred_check
        _
      $region10: #{_lambda_.9} parent=5 // pred_check_branch
        %124 = sbr.rel (%p121) target = $region12
      $region11: #{_lambda_.9} parent=5 // pred_region
        %s125 = ssub.s32 %s12, 1
        // Predicated region
        $region13: #{_lambda_.9} parent=11 // pred_check
          %p126 = pneg %p59
        $region14: #{_lambda_.9} parent=11 // pred_check_branch
          %128 = sbr.rel (%p126) target = $region16
        $region15: #{_lambda_.9} parent=11 // pred_region
          _
        $region16: #{_lambda_.9} parent=11 // pred_fallthru
          _
      $region12: #{_lambda_.9} parent=5 // pred_fallthru
        _
      %p129 = scmp.lt.s32.totalorder %s12, 2
      // Predicated region
      $region17: #{_lambda_.9} parent=5 // pred_check
        %p130 = pneg %p129
      $region18: #{_lambda_.9} parent=5 // pred_check_branch
        %132 = sbr.rel (%p130) target = $region20
      $region19: #{_lambda_.9} parent=5 // pred_region
        // Predicated region
        $region21: #{_lambda_.9} parent=19 // pred_check
          %p133 = pneg %p32
        $region22: #{_lambda_.9} parent=19 // pred_check_branch
          %135 = sbr.rel (%p133) target = $region24
        $region23: #{_lambda_.9} parent=19 // pred_region
          %s136 = smul.u32 8, %s12
          %p137 = scmp.lt.s32.totalorder %s136, 15
          %s138 = scalar_select %p137, %s136, 15
          %s139 = smul.addr %s138, 4
          %s140 = scalar_lea.vmem %s0, %s139
          %s141 = smul.u32 8, %s12
        $region24: #{_lambda_.9} parent=19 // pred_fallthru
          _
        // Predicated region
        $region25: #{_lambda_.9} parent=19 // pred_check
          %p142 = pneg %p79
        $region26: #{_lambda_.9} parent=19 // pred_check_branch
          %144 = sbr.rel (%p142) target = $region28
        $region27: #{_lambda_.9} parent=19 // pred_region
          %s145 = smul.u32 8, %s12
          %p146 = scmp.lt.s32.totalorder %s145, 15
          %s147 = scalar_select %p146, %s145, 15
          %s148 = smul.addr %s147, 8
          %s149 = scalar_lea.vmem %s2, %s148
          %s150 = smul.u32 8, %s12
        $region28: #{_lambda_.9} parent=19 // pred_fallthru
          _
      $region20: #{_lambda_.9} parent=5 // pred_fallthru
        _
      %p151 = scmp.le.s32.totalorder 1, %s12
      %p152 = scmp.lt.s32.totalorder %s12, 3
      %p153 = pnand %p151, %p152
      %p154 = pneg %p153
      // Predicated region
      $region29: #{_lambda_.9} parent=5 // pred_check
        _
      $region30: #{_lambda_.9} parent=5 // pred_check_branch
        %156 = sbr.rel (%p153) target = $region32
      $region31: #{_lambda_.9} parent=5 // pred_region
        %s157 = ssub.s32 %s12, 1
        %s158 = smul.u32 8, %s17
        %p159 = scmp.lt.s32.totalorder %s158, 15
        %s160 = scalar_select %p159, %s158, 15
        %s161 = smul.addr %s160, 4
        %s162 = scalar_lea.vmem %s0, %s161
        %p163 = pneg %p38
        %p164 = pneg %p35
        %p165 = pneg %p59
        %p166 = pneg %p56
        %s167 = smul.u32 8, %s17
        %p168 = scmp.lt.s32.totalorder %s167, 15
        %s169 = scalar_select %p168, %s167, 15
        %s170 = smul.addr %s169, 8
        %s171 = scalar_lea.vmem %s2, %s170
        %p172 = pneg %p85
        %p173 = pneg %p82
        %p174 = pneg %p111
        %p175 = pneg %p108
        %s176 = sand.u32 %s98, 1
        %s177 = scalar_lea.sflag [#allocation3], %s176
        %s178 = sand.u32 %s98, 1
        %s179 = smul.addr %s178, 64
        %s180 = scalar_lea.vmem [#allocation2], %s179
        %s181 = smul.u32 8, %s17
        %p182 = scmp.lt.s32.totalorder %s181, 15
        %s183 = scalar_select %p182, %s181, 15
        %s184 = smul.addr %s183, 4
        %s185 = scalar_lea.vmem %s0, %s184
        %s186 = smul.u32 8, %s17
        %s187 = smul.u32 8, %s17
        %p188 = scmp.lt.s32.totalorder %s187, 15
        %s189 = scalar_select %p188, %s187, 15
        %s190 = smul.addr %s189, 8
        %s191 = scalar_lea.vmem %s2, %s190
        %s192 = smul.u32 8, %s17
        %s193 = smul.u32 8, %s17
        %v195 = vld [vmem:[%s185] sm:$0xf]
        %v196 = vld [vmem:[%s185 + $0x4] sm:$0xf]
        %v197 = vld [vmem:[%s185 + $0x8] sm:$0xf]
        %v198 = vld [vmem:[%s185 + $0xc] sm:$0xf]
        %v199 = vld [vmem:[%s185 + $0x10] sm:$0xf]
        %v200 = vld [vmem:[%s185 + $0x14] sm:$0xf]
        %v201 = vld [vmem:[%s185 + $0x18] sm:$0xf]
        %v202 = vld [vmem:[%s185 + $0x1c] sm:$0xf]
        %v203 = vld [vmem:[%s1] sm:$0xf]
        %v204 = vld [vmem:[%s1 + $0x4] sm:$0xf]
        %v205 = vld [vmem:[%s1 + $0x8] sm:$0xf]
        %v206 = vld [vmem:[%s1 + $0xc] sm:$0xf]
        %v207 = vld [vmem:[%s1 + $0x10] sm:$0xf]
        %v208 = vld [vmem:[%s1 + $0x14] sm:$0xf]
        %v209 = vld [vmem:[%s1 + $0x18] sm:$0xf]
        %v210 = vld [vmem:[%s1 + $0x1c] sm:$0xf]
        %v211 = vld [vmem:[%s1 + $0x20] sm:$0xf]
        %v212 = vld [vmem:[%s191] sm:$0xff]
        %v213 = vld [vmem:[%s191 + $0x8] sm:$0xff]
        %v214 = vld [vmem:[%s191 + $0x10] sm:$0xff]
        %v215 = vld [vmem:[%s191 + $0x18] sm:$0xff]
        %v216 = vld [vmem:[%s191 + $0x20] sm:$0xff]
        %v217 = vld [vmem:[%s191 + $0x28] sm:$0xff]
        %v218 = vld [vmem:[%s191 + $0x30] sm:$0xff]
        %v219 = vld [vmem:[%s191 + $0x38] sm:$0xff]
        %v228 = vunpack.c.l.b16 %v195
        %v229 = vunpack.c.l.b16 %v196
        %v230 = vunpack.c.l.b16 %v197
        %v231 = vunpack.c.l.b16 %v198
        %v232 = vunpack.c.l.b16 %v199
        %v233 = vunpack.c.l.b16 %v200
        %v234 = vunpack.c.l.b16 %v201
        %v235 = vunpack.c.l.b16 %v202
        %v236 = vpack.c.b16 %v229, %v228
        %v237 = vpack.c.b16 %v231, %v230
        %v238 = vpack.c.b16 %v233, %v232
        %v239 = vpack.c.b16 %v235, %v234
        %v249 = vunpack.c.l.b16 %v203
        %v250 = vunpack.c.l.b16 %v204
        %v251 = vunpack.c.l.b16 %v205
        %v252 = vunpack.c.l.b16 %v206
        %v253 = vunpack.c.l.b16 %v207
        %v254 = vunpack.c.l.b16 %v208
        %v255 = vunpack.c.l.b16 %v209
        %v256 = vunpack.c.l.b16 %v210
        %v257 = vunpack.c.l.b16 %v211
        %v258 = vpack.c.b16 %v250, %v249
        %v259 = vpack.c.b16 %v252, %v251
        %v260 = vpack.c.b16 %v254, %v253
        %v261 = vpack.c.b16 %v256, %v255
        %v262 = vpack.c.b16 %v257, %v257
        %vm267 = vcmask 588800
        %v269 = vsel %vm267, %v236, 0
        %v272 = vsel %vm267, %v237, 0
        %v275 = vsel %vm267, %v238, 0
        %v278 = vsel %vm267, %v239, 0
        %vm280 = vcmask 1043456
        %v282 = vsel %vm280, %v262, 0
        %284 = vmatprep.subr.bf16.mxu0 0
        %285 = vmatpush1.bf16.msra.mxu0 %v258
        %286 = vmatprep.subr.bf16.mxu0 0
        %287 = vmatpush1.bf16.msra.mxu0 %v259
        %288 = vmatprep.subr.bf16.mxu0 0
        %289 = vmatpush1.bf16.msra.mxu0 %v260
        %290 = vmatprep.subr.bf16.mxu0 0
        %291 = vmatpush1.bf16.msra.mxu0 %v261
        %292 = vmatprep.subr.bf16.mxu0 0
        %293 = vmatpush1.bf16.msra.mxu0 %v282
        %294 = vmatprep.subr.bf16.mxu0 0
        %295 = vmatpush1.bf16.msra.mxu0 0
        %296 = vmatprep.subr.bf16.mxu0 0
        %297 = vmatpush1.bf16.msra.mxu0 0
        %298 = vmatprep.subr.bf16.mxu0 0
        %299 = vmatpush1.bf16.msra.mxu0 0
        %300 = vmatprep.subr.bf16.mxu0 0
        %301 = vmatpush1.bf16.msra.mxu0 0
        %302 = vmatprep.subr.bf16.mxu0 0
        %303 = vmatpush1.bf16.msra.mxu0 0
        %304 = vmatprep.subr.bf16.mxu0 0
        %305 = vmatpush1.bf16.msra.mxu0 0
        %306 = vmatprep.subr.bf16.mxu0 0
        %307 = vmatpush1.bf16.msra.mxu0 0
        %308 = vmatprep.subr.bf16.mxu0 0
        %309 = vmatpush1.bf16.msra.mxu0 0
        %310 = vmatprep.subr.bf16.mxu0 0
        %311 = vmatpush1.bf16.msra.mxu0 0
        %312 = vmatprep.subr.bf16.mxu0 0
        %313 = vmatpush1.bf16.msra.mxu0 0
        %314 = vmatprep.subr.bf16.mxu0 0
        %315 = vmatpush1.bf16.msra.mxu0 0
        %316 = vmatprep.mubr.bf16.mxu0 0
        %317 = vmatmul.mubr.bf16.gmra.mrb[0].mxu0 %v269
        %v318 = vpop.f32.mrb[0].mxu0
        %v319 = vadd.f32 %v212, %v318
        %v320 = vpop.f32.mrb[0].mxu0
        %v321 = vpop.f32.mrb[0].mxu0
        %v322 = vadd.f32 %v213, %v321
        %v323 = vpop.f32.mrb[0].mxu0
        %324 = vmatprep.mubr.bf16.mxu0 0
        %325 = vmatmul.mubr.bf16.gmra.mrb[0].mxu0 %v272
        %v326 = vpop.f32.mrb[0].mxu0
        %v327 = vadd.f32 %v214, %v326
        %v328 = vpop.f32.mrb[0].mxu0
        %v329 = vpop.f32.mrb[0].mxu0
        %v330 = vadd.f32 %v215, %v329
        %v331 = vpop.f32.mrb[0].mxu0
        %332 = vmatprep.mubr.bf16.mxu0 0
        %333 = vmatmul.mubr.bf16.gmra.mrb[0].mxu0 %v275
        %v334 = vpop.f32.mrb[0].mxu0
        %v335 = vadd.f32 %v216, %v334
        %v336 = vpop.f32.mrb[0].mxu0
        %v337 = vpop.f32.mrb[0].mxu0
        %v338 = vadd.f32 %v217, %v337
        %v339 = vpop.f32.mrb[0].mxu0
        %340 = vmatprep.mubr.bf16.mxu0 0
        %341 = vmatmul.mubr.bf16.gmra.mrb[0].mxu0 %v278
        %v342 = vpop.f32.mrb[0].mxu0
        %v343 = vadd.f32 %v218, %v342
        %v344 = vpop.f32.mrb[0].mxu0
        %v345 = vpop.f32.mrb[0].mxu0
        %v346 = vadd.f32 %v219, %v345
        %v347 = vpop.f32.mrb[0].mxu0
        %348 = vdwg.mxu0
        %vm349 = vcmask 64512
        %350 = vst.msk [vmem:[%s180] sm:$0xff] %vm349, %v319
        %351 = vst.msk [vmem:[%s180 + $0x8] sm:$0xff] %vm349, %v322
        %352 = vst.msk [vmem:[%s180 + $0x10] sm:$0xff] %vm349, %v327
        %353 = vst.msk [vmem:[%s180 + $0x18] sm:$0xff] %vm349, %v330
        %354 = vst.msk [vmem:[%s180 + $0x20] sm:$0xff] %vm349, %v335
        %355 = vst.msk [vmem:[%s180 + $0x28] sm:$0xff] %vm349, %v338
        %356 = vst.msk [vmem:[%s180 + $0x30] sm:$0xff] %vm349, %v343
        %357 = vst.msk [vmem:[%s180 + $0x38] sm:$0xff] %vm349, %v346
        %s358 = sand.u32 %s98, 1
        %s359 = scalar_lea.sflag [#allocation3], %s358
        %s360 = sand.u32 %s98, 1
        %s361 = smul.addr %s360, 64
        %s362 = scalar_lea.vmem [#allocation2], %s361
        // Predicated region
        $region33: #{_lambda_.9} parent=31 // pred_check
          %p363 = pneg %p108
        $region34: #{_lambda_.9} parent=31 // pred_check_branch
          %365 = sbr.rel (%p363) target = $region36
        $region35: #{_lambda_.9} parent=31 // pred_region
          %s366 = smul.u32 8, %s17
          %s368 = ssub.s32 1024, 1024
          %369 = vsyncadd %s359, %s368
          %s370 = smul.addr %s366, 128
          %s371 = scalar_lea.hbm %s3, %s370
          %s372 = sshll.u32 %s362, 4
          %s373 = int_to_ptr.vmem [resolvable:$true] %s372
          %378 = dma.vmem_to_hbm [thread:$0]  %s373, 1024, %s371, %s359, 128, 128, 8
        $region36: #{_lambda_.9} parent=31 // pred_fallthru
          _
      $region32: #{_lambda_.9} parent=5 // pred_fallthru
        _
      %p379 = scmp.le.s32.totalorder 2, %s12
      // Predicated region
      $region37: #{_lambda_.9} parent=5 // pred_check
        %p380 = pneg %p379
      $region38: #{_lambda_.9} parent=5 // pred_check_branch
        %382 = sbr.rel (%p380) target = $region40
      $region39: #{_lambda_.9} parent=5 // pred_region
        %s383 = ssub.s32 %s12, 2
        // Predicated region
        $region41: #{_lambda_.9} parent=39 // pred_check
          %p384 = pneg %p114
        $region42: #{_lambda_.9} parent=39 // pred_check_branch
          %386 = sbr.rel (%p384) target = $region44
        $region43: #{_lambda_.9} parent=39 // pred_region
          %s387 = sand.u32 %s99, 1
          %s388 = scalar_lea.sflag [#allocation3], %s387
          %s389 = sand.u32 %s99, 1
          %s390 = smul.addr %s389, 64
          %s391 = scalar_lea.vmem [#allocation2], %s390
          %392 = dma.done %s388, 1024
        $region44: #{_lambda_.9} parent=39 // pred_fallthru
          _
      $region40: #{_lambda_.9} parent=5 // pred_fallthru
        _
    $region6: #{_lambda_.9} parent=1 // loop_footer
      %s16 = sadd.s32 1, %s12
    $region7: #{_lambda_.9} parent=1 // loop_footer_branch
      %11 = sbr.rel target = $region3
    $region8: #{_lambda_.9} parent=1 // loop_exit
      _
    %393 = vsyncpa [#allocation3], 1
    %s394 = scalar_lea.sflag [#allocation3], 1
    %395 = vsyncpa %s394, 1

</llo_original>
